<compile_context>
chip_gen: v6e
topology: v6e:2x2x1
jax: 0.10.0
libtpu: 0.0.40
codegen_flags: <defaults>
</compile_context>

<pallas_src>
from functools import partial

import jax
import jax.numpy as jnp
from jax.experimental import pallas as pl
from jax.experimental.pallas import tpu as pltpu


def _round_up(v, m):
    return ((v + m - 1) // m) * m


def _leaky_relu(h, slope=0.2):   # nn.LeakyReLU(0.2) in the PyTorch module
    return jnp.where(h > 0, h, slope * h)


# ----------------------------------------------------------------------------
# Kernel
# ----------------------------------------------------------------------------
def cvae_kernel(
    # activations (per batch tile)
    xc_ref,      # [tB, ICp]  bf16   [x | cond | 0]
    cond_ref,    # [tB, Cp]   bf16
    eps_ref,     # [tB, Lp]   f32    (randn epsilon, zero in padding lanes)
    # encoder params (weights bf16, biases f32)
    w1_ref, b1_ref,        # [ICp, Hp], [1, Hp]
    w2_ref, b2_ref,        # [Hp, Hp],  [1, Hp]
    wmv_ref, bmv_ref,      # [Hp, 2Lp], [1, 2Lp]   fused mean | log_var head
    # decoder params
    wd1z_ref, wd1c_ref, bd1_ref,   # [Lp, Hp], [Cp, Hp], [1, Hp]
    wd2_ref, bd2_ref,              # [Hp, Hp], [1, Hp]
    wo_ref, bo_ref,                # [Hp, Ip], [1, Ip]
    # outputs (two lane-dense slabs -> no in-kernel concat)
    xhat_ref,    # [tB, Ip]   f32
    mv_ref,      # [tB, 2Lp]  f32   [mean | log_var]
    *, lp,
):
    f32 = jnp.float32
    bw = w2_ref.dtype   # bf16 matmul-operand dtype (f32 accumulation)

    xc = xc_ref[...]
    cond = cond_ref[...]
    eps = eps_ref[...]

    # ---- Encoder (torch.cat([x, cond]) already packed into xc's lanes) ----
    h = jnp.dot(xc, w1_ref[...], preferred_element_type=f32) + b1_ref[...]
    h = _leaky_relu(h)
    h = jnp.dot(h.astype(bw), w2_ref[...], preferred_element_type=f32) + b2_ref[...]
    h = _leaky_relu(h)

    # Fused mean / log_var head; slice at the vreg-aligned boundary lp (free).
    mv = jnp.dot(h.astype(bw), wmv_ref[...], preferred_element_type=f32) + bmv_ref[...]
    mean = mv[:, :lp]
    log_var = mv[:, lp:]

    # ---- Reparameterization (f32 on VPU/EUP): z = mean + exp(0.5*lv)*eps ----
    # Padding lanes: mean = 0, exp(0.5*0) = 1, eps = 0 -> z padding stays 0.
    z = mean + jnp.exp(0.5 * log_var) * eps

    # ---- Decoder (torch.cat([z, cond]) as split-weight sum) ----
    hd = (
        jnp.dot(z.astype(bw), wd1z_ref[...], preferred_element_type=f32)
        + jnp.dot(cond, wd1c_ref[...], preferred_element_type=f32)
        + bd1_ref[...]
    )
    hd = _leaky_relu(hd)
    hd = jnp.dot(hd.astype(bw), wd2_ref[...], preferred_element_type=f32) + bd2_ref[...]
    hd = _leaky_relu(hd)
    x_hat = jnp.dot(hd.astype(bw), wo_ref[...], preferred_element_type=f32) + bo_ref[...]

    # Two aligned, lane-dense stores (no lane concatenation / XLU shifts).
    xhat_ref[...] = x_hat.astype(xhat_ref.dtype)
    mv_ref[...] = mv.astype(mv_ref.dtype)


# ----------------------------------------------------------------------------
# Wrapper
# ----------------------------------------------------------------------------
_WEIGHT_ORDER = (
    "w1", "b1", "w2", "b2", "wmv", "bmv",
    "wd1z", "wd1c", "bd1", "wd2", "bd2", "wo", "bo",
)


def _pack_inputs(x, condition, eps, dims):
    """Zero-padded, lane-dense input slabs. cond is packed into x's padding."""
    B = x.shape[0]
    bf = jnp.bfloat16
    i_d, c_d, l_d = dims["input_dim"], dims["condition_dim"], dims["latent_dim"]
    ICp, Cp, Lp = dims["ICp"], dims["Cp"], dims["Lp"]

    xc = jnp.zeros((B, ICp), bf)
    xc = xc.at[:, :i_d].set(x.astype(bf))
    xc = xc.at[:, i_d:i_d + c_d].set(condition.astype(bf))
    cond_p = jnp.zeros((B, Cp), bf).at[:, :c_d].set(condition.astype(bf))
    eps_p = jnp.zeros((B, Lp), jnp.float32).at[:, :l_d].set(eps.astype(jnp.float32))
    return xc, cond_p, eps_p


def _choose_tile_b(B, max_tile_b):
    if B <= 16:
        return B
    # >=2 grid steps so both v7x TensorCores get a 'parallel' step; multiple
    # of 16 (bf16 sublane packing); capped for v5e VMEM / v6e MXU alignment.
    half = _round_up(-(-B // 2), 16)
    return max(16, min(max_tile_b, half))


def _byte_sizes(dims):
    Ip, Cp, Hp, Lp, ICp = (dims[k] for k in ("Ip", "Cp", "Hp", "Lp", "ICp"))
    w_elems = (ICp * Hp + Hp * Hp + Hp * 2 * Lp
               + Lp * Hp + Cp * Hp + Hp * Hp + Hp * Ip)
    wb_bytes = 2 * w_elems + 4 * (4 * Hp + 2 * Lp + Ip)   # bf16 W + f32 b
    return w_elems, wb_bytes


def _pallas_forward(xc, cond_p, eps_p, params, dims, tile_b,
                    single_buffer_weights):
    B = xc.shape[0]
    Ip, Cp, Hp, Lp, ICp = (dims[k] for k in ("Ip", "Cp", "Hp", "Lp", "ICp"))
    grid = (pl.cdiv(B, tile_b),)

    def row_spec(f):
        return pl.BlockSpec((tile_b, f), lambda i: (i, 0))

    def const_spec(shape):
        if single_buffer_weights:
            # Weights are grid-invariant: one VMEM buffer, no double-buffering.
            return pl.BlockSpec(shape, lambda i: (0, 0),
                                pipeline_mode=pl.Buffered(1))
        return pl.BlockSpec(shape, lambda i: (0, 0))

    weight_shapes = {
        "w1": (ICp, Hp), "b1": (1, Hp),
        "w2": (Hp, Hp), "b2": (1, Hp),
        "wmv": (Hp, 2 * Lp), "bmv": (1, 2 * Lp),
        "wd1z": (Lp, Hp), "wd1c": (Cp, Hp), "bd1": (1, Hp),
        "wd2": (Hp, Hp), "bd2": (1, Hp),
        "wo": (Hp, Ip), "bo": (1, Ip),
    }

    in_specs = ([row_spec(ICp), row_spec(Cp), row_spec(Lp)]
                + [const_spec(weight_shapes[k]) for k in _WEIGHT_ORDER])
    out_specs = (row_spec(Ip), row_spec(2 * Lp))
    out_shape = (
        jax.ShapeDtypeStruct((B, Ip), jnp.float32),
        jax.ShapeDtypeStruct((B, 2 * Lp), jnp.float32),
    )

    # --- VMEM budget & advisory cost estimate ---
    w_elems, wb_bytes = _byte_sizes(dims)
    io_row_bytes = 2 * ICp + 2 * Cp + 4 * Lp + 4 * Ip + 8 * Lp
    act_bytes = 2 * tile_b * io_row_bytes          # double-buffered act + out
    live_bytes = 6 * tile_b * Hp * 4               # f32 h/hd/mv temporaries
    vmem_limit = int(min(max(2 * (wb_bytes + act_bytes + live_bytes), 32 << 20),
                         112 << 20))
    cost = pl.CostEstimate(
        flops=2 * B * w_elems,
        transcendentals=B * Lp,
        bytes_accessed=wb_bytes + B * io_row_bytes,
    )

    call = pl.pallas_call(
        partial(cvae_kernel, lp=Lp),
        out_shape=out_shape,
        grid=grid,
        in_specs=in_specs,
        out_specs=out_specs,
        compiler_params=pltpu.CompilerParams(
            dimension_semantics=("parallel",),
            vmem_limit_bytes=vmem_limit,
        ),
        cost_estimate=cost,
    )
    inputs = (xc, cond_p, eps_p) + tuple(params[k] for k in _WEIGHT_ORDER)
    return call(*inputs)


def cvae_forward(x, condition, eps, params, *, max_tile_b=256):
    """Fused CVAE forward. Returns (x_hat, mean, log_var), matching CVAE.forward."""
    dims = params["dims"]
    B, input_dim = x.shape
    cond_dim = condition.shape[1]
    latent_dim = eps.shape[1]
    assert input_dim == dims["input_dim"]
    assert cond_dim == dims["condition_dim"]
    assert latent_dim == dims["latent_dim"]
    Lp = dims["Lp"]

    xc, cond_p, eps_p = _pack_inputs(x, condition, eps, dims)
    tile_b = _choose_tile_b(B, max_tile_b)

    try:
        out_x, out_mv = _pallas_forward(xc, cond_p, eps_p, params, dims, tile_b,
                                        single_buffer_weights=True)
    except Exception:
        # TODO(synk): pipeline_mode=pl.Buffered(1) not supported on this JAX
        # build; fall back to default (double-buffered) weight blocks.
        out_x, out_mv = _pallas_forward(xc, cond_p, eps_p, params, dims, tile_b,
                                        single_buffer_weights=False)

    x_hat = out_x[:, :input_dim]
    mean = out_mv[:, :latent_dim]
    log_var = out_mv[:, Lp:Lp + latent_dim]
    return x_hat, mean, log_var


# ----------------------------------------------------------------------------
# Parameters (PyTorch-Linear-style init, pre-padded to lane-dense layouts)
# ----------------------------------------------------------------------------
def init_params(key, input_dim, hidden_dim, latent_dim, condition_dim, pad=128):
    Ip = _round_up(input_dim, pad)
    Cp = _round_up(condition_dim, pad)
    Hp = _round_up(hidden_dim, pad)
    Lp = _round_up(latent_dim, pad)
    ICp = _round_up(input_dim + condition_dim, pad)

    def linear(k, fan_in, fan_out):
        kw, kb = jax.random.split(k)
        bound = 1.0 / (float(fan_in) ** 0.5)
        w = jax.random.uniform(kw, (fan_in, fan_out), jnp.float32, -bound, bound)
        b = jax.random.uniform(kb, (fan_out,), jnp.float32, -bound, bound)
        return w, b

    def pad_w(w, rows, cols):
        out = jnp.zeros((rows, cols), jnp.float32)
        return out.at[:w.shape[0], :w.shape[1]].set(w).astype(jnp.bfloat16)

    def pad_b(b, cols):
        return jnp.zeros((1, cols), jnp.float32).at[0, :b.shape[0]].set(b)

    keys = jax.random.split(key, 7)
    p = {}

    # Encoder FC_input on the packed [x | cond] lanes -> single padded weight.
    w1, b1 = linear(keys[0], input_dim + condition_dim, hidden_dim)
    p["w1"], p["b1"] = pad_w(w1, ICp, Hp), pad_b(b1, Hp)

    w2, b2 = linear(keys[1], hidden_dim, hidden_dim)
    p["w2"], p["b2"] = pad_w(w2, Hp, Hp), pad_b(b2, Hp)

    # Fused mean|log_var head, vreg-aligned: mean -> lanes [0,Lp), var -> [Lp,2Lp).
    wm, bm = linear(keys[2], hidden_dim, latent_dim)
    wv, bv = linear(keys[3], hidden_dim, latent_dim)
    wmv = jnp.zeros((Hp, 2 * Lp), jnp.float32)
    wmv = wmv.at[:hidden_dim, :latent_dim].set(wm)
    wmv = wmv.at[:hidden_dim, Lp:Lp + latent_dim].set(wv)
    p["wmv"] = wmv.astype(jnp.bfloat16)
    bmv = jnp.zeros((1, 2 * Lp), jnp.float32)
    bmv = bmv.at[0, :latent_dim].set(bm)
    bmv = bmv.at[0, Lp:Lp + latent_dim].set(bv)
    p["bmv"] = bmv

    # Decoder FC_hidden split into z-part and condition-part (no concat needed).
    wd1, bd1 = linear(keys[4], latent_dim + condition_dim, hidden_dim)
    p["wd1z"] = pad_w(wd1[:latent_dim], Lp, Hp)
    p["wd1c"] = pad_w(wd1[latent_dim:], Cp, Hp)
    p["bd1"] = pad_b(bd1, Hp)

    wd2, bd2 = linear(keys[5], hidden_dim, hidden_dim)
    p["wd2"], p["bd2"] = pad_w(wd2, Hp, Hp), pad_b(bd2, Hp)

    wo, bo = linear(keys[6], hidden_dim, input_dim)
    p["wo"], p["bo"] = pad_w(wo, Hp, Ip), pad_b(bo, Ip)

    p["dims"] = dict(input_dim=input_dim, condition_dim=condition_dim,
                     hidden_dim=hidden_dim, latent_dim=latent_dim,
                     Ip=Ip, Cp=Cp, Hp=Hp, Lp=Lp, ICp=ICp)
    return p


# ----------------------------------------------------------------------------
# Pure-JAX reference (same bf16-operand / f32-accumulate math)
# ----------------------------------------------------------------------------
def _reference_forward(x, condition, eps, params):
    d = params["dims"]
    Lp, i_d, l_d = d["Lp"], d["input_dim"], d["latent_dim"]
    xc, cond_p, eps_p = _pack_inputs(x, condition, eps, d)

    f32, bw = jnp.float32, jnp.bfloat16
    leaky = lambda v: jnp.where(v > 0, v, 0.2 * v)
    dot = lambda a, w: jnp.dot(a.astype(bw), w, preferred_element_type=f32)

    h = leaky(dot(xc, params["w1"]) + params["b1"])
    h = leaky(dot(h, params["w2"]) + params["b2"])
    mv = dot(h, params["wmv"]) + params["bmv"]
    mean, log_var = mv[:, :Lp], mv[:, Lp:]
    z = mean + jnp.exp(0.5 * log_var) * eps_p
    hd = leaky(dot(z, params["wd1z"]) + dot(cond_p, params["wd1c"]) + params["bd1"])
    hd = leaky(dot(hd, params["wd2"]) + params["bd2"])
    x_hat = dot(hd, params["wo"]) + params["bo"]
    return x_hat[:, :i_d], mean[:, :l_d], log_var[:, :l_d]


# ----------------------------------------------------------------------------
if __name__ == "__main__":
    # Small shapes consistent with the module's fully-connected forward.
    B = 8
    input_dim = 16
    condition_dim = 8
    hidden_dim = 32
    latent_dim = 4

    key = jax.random.PRNGKey(0)
    kx, kc, ke, kp = jax.random.split(key, 4)

    x = jax.random.normal(kx, (B, input_dim), jnp.float32)
    condition = jax.random.normal(kc, (B, condition_dim), jnp.float32)
    # randn_like epsilon from the reparameterization trick (PyTorch draws it
    # inside forward); generated host-side deterministically, same semantics.
    eps = jax.random.normal(ke, (B, latent_dim), jnp.float32)

    params = init_params(kp, input_dim, hidden_dim, latent_dim, condition_dim)

    x_hat, mean, log_var = cvae_forward(x, condition, eps, params)
    jax.block_until_ready((x_hat, mean, log_var))

    assert x_hat.shape == (B, input_dim)
    assert mean.shape == (B, latent_dim)
    assert log_var.shape == (B, latent_dim)

    ref_x_hat, ref_mean, ref_log_var = _reference_forward(x, condition, eps, params)
    assert jnp.allclose(x_hat, ref_x_hat, atol=2e-2, rtol=2e-2)
    assert jnp.allclose(mean, ref_mean, atol=2e-2, rtol=2e-2)
    assert jnp.allclose(log_var, ref_log_var, atol=2e-2, rtol=2e-2)

    print("KERNEL_OK")
</pallas_src>

<mosaic_0001>
module attributes {stable_mosaic.version = 11 : i64} {
  func.func @cvae_kernel(%arg0: i32, %arg1: memref<8x128xbf16, #tpu.memory_space<vmem>>, %arg2: memref<8x128xbf16, #tpu.memory_space<vmem>>, %arg3: memref<8x128xf32, #tpu.memory_space<vmem>>, %arg4: memref<128x128xbf16, #tpu.memory_space<vmem>>, %arg5: memref<1x128xf32, #tpu.memory_space<vmem>>, %arg6: memref<128x128xbf16, #tpu.memory_space<vmem>>, %arg7: memref<1x128xf32, #tpu.memory_space<vmem>>, %arg8: memref<128x256xbf16, #tpu.memory_space<vmem>>, %arg9: memref<1x256xf32, #tpu.memory_space<vmem>>, %arg10: memref<128x128xbf16, #tpu.memory_space<vmem>>, %arg11: memref<128x128xbf16, #tpu.memory_space<vmem>>, %arg12: memref<1x128xf32, #tpu.memory_space<vmem>>, %arg13: memref<128x128xbf16, #tpu.memory_space<vmem>>, %arg14: memref<1x128xf32, #tpu.memory_space<vmem>>, %arg15: memref<128x128xbf16, #tpu.memory_space<vmem>>, %arg16: memref<1x128xf32, #tpu.memory_space<vmem>>, %arg17: memref<8x128xf32, #tpu.memory_space<vmem>>, %arg18: memref<8x256xf32, #tpu.memory_space<vmem>>) attributes {dimension_semantics = [#tpu.dimension_semantics<parallel>], iteration_bounds = array<i64: 1>, scalar_prefetch = 0 : i64, scratch_operands = 0 : i64, tpu.core_type = #tpu.core_type<tc>, window_params = [{transform_indices = @transform_0, window_bounds = array<i64: 8, 128>}, {transform_indices = @transform_1, window_bounds = array<i64: 8, 128>}, {transform_indices = @transform_2, window_bounds = array<i64: 8, 128>}, {pipeline_mode = #tpu.pipeline_mode<synchronous>, transform_indices = @transform_3, window_bounds = array<i64: 128, 128>}, {pipeline_mode = #tpu.pipeline_mode<synchronous>, transform_indices = @transform_4, window_bounds = array<i64: 1, 128>}, {pipeline_mode = #tpu.pipeline_mode<synchronous>, transform_indices = @transform_5, window_bounds = array<i64: 128, 128>}, {pipeline_mode = #tpu.pipeline_mode<synchronous>, transform_indices = @transform_6, window_bounds = array<i64: 1, 128>}, {pipeline_mode = #tpu.pipeline_mode<synchronous>, transform_indices = @transform_7, window_bounds = array<i64: 128, 256>}, {pipeline_mode = #tpu.pipeline_mode<synchronous>, transform_indices = @transform_8, window_bounds = array<i64: 1, 256>}, {pipeline_mode = #tpu.pipeline_mode<synchronous>, transform_indices = @transform_9, window_bounds = array<i64: 128, 128>}, {pipeline_mode = #tpu.pipeline_mode<synchronous>, transform_indices = @transform_10, window_bounds = array<i64: 128, 128>}, {pipeline_mode = #tpu.pipeline_mode<synchronous>, transform_indices = @transform_11, window_bounds = array<i64: 1, 128>}, {pipeline_mode = #tpu.pipeline_mode<synchronous>, transform_indices = @transform_12, window_bounds = array<i64: 128, 128>}, {pipeline_mode = #tpu.pipeline_mode<synchronous>, transform_indices = @transform_13, window_bounds = array<i64: 1, 128>}, {pipeline_mode = #tpu.pipeline_mode<synchronous>, transform_indices = @transform_14, window_bounds = array<i64: 128, 128>}, {pipeline_mode = #tpu.pipeline_mode<synchronous>, transform_indices = @transform_15, window_bounds = array<i64: 1, 128>}, {transform_indices = @transform_16, window_bounds = array<i64: 8, 128>}, {transform_indices = @transform_17, window_bounds = array<i64: 8, 256>}]} {
    %c0 = arith.constant 0 : index
    %c0_0 = arith.constant 0 : index
    %0 = vector.load %arg1[%c0, %c0_0] : memref<8x128xbf16, #tpu.memory_space<vmem>>, vector<8x128xbf16>
    %c0_1 = arith.constant 0 : index
    %c0_2 = arith.constant 0 : index
    %1 = vector.load %arg2[%c0_1, %c0_2] : memref<8x128xbf16, #tpu.memory_space<vmem>>, vector<8x128xbf16>
    %c0_3 = arith.constant 0 : index
    %c0_4 = arith.constant 0 : index
    %2 = vector.load %arg3[%c0_3, %c0_4] : memref<8x128xf32, #tpu.memory_space<vmem>>, vector<8x128xf32>
    %c0_5 = arith.constant 0 : index
    %c0_6 = arith.constant 0 : index
    %3 = vector.load %arg4[%c0_5, %c0_6] : memref<128x128xbf16, #tpu.memory_space<vmem>>, vector<128x128xbf16>
    %cst = arith.constant dense<0.000000e+00> : vector<8x128xf32>
    %4 = tpu.matmul %0, %3, %cst {dimension_numbers = #tpu.dot_dimension_numbers<[1], [0], [0], [1], [0, 0, 1, 1], [], []>} : vector<8x128xbf16>, vector<128x128xbf16>, vector<8x128xf32> -> vector<8x128xf32>
    %c0_7 = arith.constant 0 : index
    %c0_8 = arith.constant 0 : index
    %5 = vector.load %arg5[%c0_7, %c0_8] : memref<1x128xf32, #tpu.memory_space<vmem>>, vector<1x128xf32>
    %6 = vector.broadcast %5 : vector<1x128xf32> to vector<8x128xf32>
    %7 = arith.addf %4, %6 : vector<8x128xf32>
    %cst_9 = arith.constant 0.000000e+00 : f32
    %8 = vector.broadcast %cst_9 : f32 to vector<8x128xf32>
    %9 = arith.cmpf ogt, %7, %8 : vector<8x128xf32>
    %cst_10 = arith.constant 2.000000e-01 : f32
    %10 = vector.broadcast %cst_10 : f32 to vector<8x128xf32>
    %11 = arith.mulf %10, %7 : vector<8x128xf32>
    %12 = arith.select %9, %7, %11 : vector<8x128xi1>, vector<8x128xf32>
    %13 = arith.truncf %12 : vector<8x128xf32> to vector<8x128xbf16>
    %c0_11 = arith.constant 0 : index
    %c0_12 = arith.constant 0 : index
    %14 = vector.load %arg6[%c0_11, %c0_12] : memref<128x128xbf16, #tpu.memory_space<vmem>>, vector<128x128xbf16>
    %cst_13 = arith.constant dense<0.000000e+00> : vector<8x128xf32>
    %15 = tpu.matmul %13, %14, %cst_13 {dimension_numbers = #tpu.dot_dimension_numbers<[1], [0], [0], [1], [0, 0, 1, 1], [], []>} : vector<8x128xbf16>, vector<128x128xbf16>, vector<8x128xf32> -> vector<8x128xf32>
    %c0_14 = arith.constant 0 : index
    %c0_15 = arith.constant 0 : index
    %16 = vector.load %arg7[%c0_14, %c0_15] : memref<1x128xf32, #tpu.memory_space<vmem>>, vector<1x128xf32>
    %17 = vector.broadcast %16 : vector<1x128xf32> to vector<8x128xf32>
    %18 = arith.addf %15, %17 : vector<8x128xf32>
    %cst_16 = arith.constant 0.000000e+00 : f32
    %19 = vector.broadcast %cst_16 : f32 to vector<8x128xf32>
    %20 = arith.cmpf ogt, %18, %19 : vector<8x128xf32>
    %cst_17 = arith.constant 2.000000e-01 : f32
    %21 = vector.broadcast %cst_17 : f32 to vector<8x128xf32>
    %22 = arith.mulf %21, %18 : vector<8x128xf32>
    %23 = arith.select %20, %18, %22 : vector<8x128xi1>, vector<8x128xf32>
    %24 = arith.truncf %23 : vector<8x128xf32> to vector<8x128xbf16>
    %c0_18 = arith.constant 0 : index
    %c0_19 = arith.constant 0 : index
    %25 = vector.load %arg8[%c0_18, %c0_19] : memref<128x256xbf16, #tpu.memory_space<vmem>>, vector<128x256xbf16>
    %cst_20 = arith.constant dense<0.000000e+00> : vector<8x256xf32>
    %26 = tpu.matmul %24, %25, %cst_20 {dimension_numbers = #tpu.dot_dimension_numbers<[1], [0], [0], [1], [0, 0, 1, 1], [], []>} : vector<8x128xbf16>, vector<128x256xbf16>, vector<8x256xf32> -> vector<8x256xf32>
    %c0_21 = arith.constant 0 : index
    %c0_22 = arith.constant 0 : index
    %27 = vector.load %arg9[%c0_21, %c0_22] : memref<1x256xf32, #tpu.memory_space<vmem>>, vector<1x256xf32>
    %28 = vector.broadcast %27 : vector<1x256xf32> to vector<8x256xf32>
    %29 = arith.addf %26, %28 : vector<8x256xf32>
    %30 = vector.extract_strided_slice %29 {offsets = [0, 0], sizes = [8, 128], strides = [1, 1]} : vector<8x256xf32> to vector<8x128xf32>
    %31 = vector.extract_strided_slice %29 {offsets = [0, 128], sizes = [8, 128], strides = [1, 1]} : vector<8x256xf32> to vector<8x128xf32>
    %cst_23 = arith.constant 5.000000e-01 : f32
    %32 = vector.broadcast %cst_23 : f32 to vector<8x128xf32>
    %33 = arith.mulf %32, %31 : vector<8x128xf32>
    %34 = math.exp %33 : vector<8x128xf32>
    %35 = arith.mulf %34, %2 : vector<8x128xf32>
    %36 = arith.addf %30, %35 : vector<8x128xf32>
    %37 = arith.truncf %36 : vector<8x128xf32> to vector<8x128xbf16>
    %c0_24 = arith.constant 0 : index
    %c0_25 = arith.constant 0 : index
    %38 = vector.load %arg10[%c0_24, %c0_25] : memref<128x128xbf16, #tpu.memory_space<vmem>>, vector<128x128xbf16>
    %cst_26 = arith.constant dense<0.000000e+00> : vector<8x128xf32>
    %39 = tpu.matmul %37, %38, %cst_26 {dimension_numbers = #tpu.dot_dimension_numbers<[1], [0], [0], [1], [0, 0, 1, 1], [], []>} : vector<8x128xbf16>, vector<128x128xbf16>, vector<8x128xf32> -> vector<8x128xf32>
    %c0_27 = arith.constant 0 : index
    %c0_28 = arith.constant 0 : index
    %40 = vector.load %arg11[%c0_27, %c0_28] : memref<128x128xbf16, #tpu.memory_space<vmem>>, vector<128x128xbf16>
    %cst_29 = arith.constant dense<0.000000e+00> : vector<8x128xf32>
    %41 = tpu.matmul %1, %40, %cst_29 {dimension_numbers = #tpu.dot_dimension_numbers<[1], [0], [0], [1], [0, 0, 1, 1], [], []>} : vector<8x128xbf16>, vector<128x128xbf16>, vector<8x128xf32> -> vector<8x128xf32>
    %42 = arith.addf %39, %41 : vector<8x128xf32>
    %c0_30 = arith.constant 0 : index
    %c0_31 = arith.constant 0 : index
    %43 = vector.load %arg12[%c0_30, %c0_31] : memref<1x128xf32, #tpu.memory_space<vmem>>, vector<1x128xf32>
    %44 = vector.broadcast %43 : vector<1x128xf32> to vector<8x128xf32>
    %45 = arith.addf %42, %44 : vector<8x128xf32>
    %cst_32 = arith.constant 0.000000e+00 : f32
    %46 = vector.broadcast %cst_32 : f32 to vector<8x128xf32>
    %47 = arith.cmpf ogt, %45, %46 : vector<8x128xf32>
    %cst_33 = arith.constant 2.000000e-01 : f32
    %48 = vector.broadcast %cst_33 : f32 to vector<8x128xf32>
    %49 = arith.mulf %48, %45 : vector<8x128xf32>
    %50 = arith.select %47, %45, %49 : vector<8x128xi1>, vector<8x128xf32>
    %51 = arith.truncf %50 : vector<8x128xf32> to vector<8x128xbf16>
    %c0_34 = arith.constant 0 : index
    %c0_35 = arith.constant 0 : index
    %52 = vector.load %arg13[%c0_34, %c0_35] : memref<128x128xbf16, #tpu.memory_space<vmem>>, vector<128x128xbf16>
    %cst_36 = arith.constant dense<0.000000e+00> : vector<8x128xf32>
    %53 = tpu.matmul %51, %52, %cst_36 {dimension_numbers = #tpu.dot_dimension_numbers<[1], [0], [0], [1], [0, 0, 1, 1], [], []>} : vector<8x128xbf16>, vector<128x128xbf16>, vector<8x128xf32> -> vector<8x128xf32>
    %c0_37 = arith.constant 0 : index
    %c0_38 = arith.constant 0 : index
    %54 = vector.load %arg14[%c0_37, %c0_38] : memref<1x128xf32, #tpu.memory_space<vmem>>, vector<1x128xf32>
    %55 = vector.broadcast %54 : vector<1x128xf32> to vector<8x128xf32>
    %56 = arith.addf %53, %55 : vector<8x128xf32>
    %cst_39 = arith.constant 0.000000e+00 : f32
    %57 = vector.broadcast %cst_39 : f32 to vector<8x128xf32>
    %58 = arith.cmpf ogt, %56, %57 : vector<8x128xf32>
    %cst_40 = arith.constant 2.000000e-01 : f32
    %59 = vector.broadcast %cst_40 : f32 to vector<8x128xf32>
    %60 = arith.mulf %59, %56 : vector<8x128xf32>
    %61 = arith.select %58, %56, %60 : vector<8x128xi1>, vector<8x128xf32>
    %62 = arith.truncf %61 : vector<8x128xf32> to vector<8x128xbf16>
    %c0_41 = arith.constant 0 : index
    %c0_42 = arith.constant 0 : index
    %63 = vector.load %arg15[%c0_41, %c0_42] : memref<128x128xbf16, #tpu.memory_space<vmem>>, vector<128x128xbf16>
    %cst_43 = arith.constant dense<0.000000e+00> : vector<8x128xf32>
    %64 = tpu.matmul %62, %63, %cst_43 {dimension_numbers = #tpu.dot_dimension_numbers<[1], [0], [0], [1], [0, 0, 1, 1], [], []>} : vector<8x128xbf16>, vector<128x128xbf16>, vector<8x128xf32> -> vector<8x128xf32>
    %c0_44 = arith.constant 0 : index
    %c0_45 = arith.constant 0 : index
    %65 = vector.load %arg16[%c0_44, %c0_45] : memref<1x128xf32, #tpu.memory_space<vmem>>, vector<1x128xf32>
    %66 = vector.broadcast %65 : vector<1x128xf32> to vector<8x128xf32>
    %67 = arith.addf %64, %66 : vector<8x128xf32>
    %c0_46 = arith.constant 0 : index
    %c0_47 = arith.constant 0 : index
    %68 = vector.load %arg17[%c0_46, %c0_47] : memref<8x128xf32, #tpu.memory_space<vmem>>, vector<8x128xf32>
    tpu.vector_store %arg17[%c0_46, %c0_47], %67 {strides = array<i32>} : memref<8x128xf32, #tpu.memory_space<vmem>>, vector<8x128xf32>,
    %c0_48 = arith.constant 0 : index
    %c0_49 = arith.constant 0 : index
    %69 = vector.load %arg18[%c0_48, %c0_49] : memref<8x256xf32, #tpu.memory_space<vmem>>, vector<8x256xf32>
    tpu.vector_store %arg18[%c0_48, %c0_49], %29 {strides = array<i32>} : memref<8x256xf32, #tpu.memory_space<vmem>>, vector<8x256xf32>,
    return
  }
  func.func @transform_0(%arg0: i32) -> (i32, i32) {
    %c0_i32 = arith.constant 0 : i32
    %c0_i32_0 = arith.constant 0 : i32
    return %arg0, %c0_i32 : i32, i32
  }
  func.func @transform_1(%arg0: i32) -> (i32, i32) {
    %c0_i32 = arith.constant 0 : i32
    %c0_i32_0 = arith.constant 0 : i32
    return %arg0, %c0_i32 : i32, i32
  }
  func.func @transform_2(%arg0: i32) -> (i32, i32) {
    %c0_i32 = arith.constant 0 : i32
    %c0_i32_0 = arith.constant 0 : i32
    return %arg0, %c0_i32 : i32, i32
  }
  func.func @transform_3(%arg0: i32) -> (i32, i32) {
    %c0_i32 = arith.constant 0 : i32
    %c0_i32_0 = arith.constant 0 : i32
    %c0_i32_1 = arith.constant 0 : i32
    return %c0_i32, %c0_i32_0 : i32, i32
  }
  func.func @transform_4(%arg0: i32) -> (i32, i32) {
    %c0_i32 = arith.constant 0 : i32
    %c0_i32_0 = arith.constant 0 : i32
    %c0_i32_1 = arith.constant 0 : i32
    return %c0_i32, %c0_i32_0 : i32, i32
  }
  func.func @transform_5(%arg0: i32) -> (i32, i32) {
    %c0_i32 = arith.constant 0 : i32
    %c0_i32_0 = arith.constant 0 : i32
    %c0_i32_1 = arith.constant 0 : i32
    return %c0_i32, %c0_i32_0 : i32, i32
  }
  func.func @transform_6(%arg0: i32) -> (i32, i32) {
    %c0_i32 = arith.constant 0 : i32
    %c0_i32_0 = arith.constant 0 : i32
    %c0_i32_1 = arith.constant 0 : i32
    return %c0_i32, %c0_i32_0 : i32, i32
  }
  func.func @transform_7(%arg0: i32) -> (i32, i32) {
    %c0_i32 = arith.constant 0 : i32
    %c0_i32_0 = arith.constant 0 : i32
    %c0_i32_1 = arith.constant 0 : i32
    return %c0_i32, %c0_i32_0 : i32, i32
  }
  func.func @transform_8(%arg0: i32) -> (i32, i32) {
    %c0_i32 = arith.constant 0 : i32
    %c0_i32_0 = arith.constant 0 : i32
    %c0_i32_1 = arith.constant 0 : i32
    return %c0_i32, %c0_i32_0 : i32, i32
  }
  func.func @transform_9(%arg0: i32) -> (i32, i32) {
    %c0_i32 = arith.constant 0 : i32
    %c0_i32_0 = arith.constant 0 : i32
    %c0_i32_1 = arith.constant 0 : i32
    return %c0_i32, %c0_i32_0 : i32, i32
  }
  func.func @transform_10(%arg0: i32) -> (i32, i32) {
    %c0_i32 = arith.constant 0 : i32
    %c0_i32_0 = arith.constant 0 : i32
    %c0_i32_1 = arith.constant 0 : i32
    return %c0_i32, %c0_i32_0 : i32, i32
  }
  func.func @transform_11(%arg0: i32) -> (i32, i32) {
    %c0_i32 = arith.constant 0 : i32
    %c0_i32_0 = arith.constant 0 : i32
    %c0_i32_1 = arith.constant 0 : i32
    return %c0_i32, %c0_i32_0 : i32, i32
  }
  func.func @transform_12(%arg0: i32) -> (i32, i32) {
    %c0_i32 = arith.constant 0 : i32
    %c0_i32_0 = arith.constant 0 : i32
    %c0_i32_1 = arith.constant 0 : i32
    return %c0_i32, %c0_i32_0 : i32, i32
  }
  func.func @transform_13(%arg0: i32) -> (i32, i32) {
    %c0_i32 = arith.constant 0 : i32
    %c0_i32_0 = arith.constant 0 : i32
    %c0_i32_1 = arith.constant 0 : i32
    return %c0_i32, %c0_i32_0 : i32, i32
  }
  func.func @transform_14(%arg0: i32) -> (i32, i32) {
    %c0_i32 = arith.constant 0 : i32
    %c0_i32_0 = arith.constant 0 : i32
    %c0_i32_1 = arith.constant 0 : i32
    return %c0_i32, %c0_i32_0 : i32, i32
  }
  func.func @transform_15(%arg0: i32) -> (i32, i32) {
    %c0_i32 = arith.constant 0 : i32
    %c0_i32_0 = arith.constant 0 : i32
    %c0_i32_1 = arith.constant 0 : i32
    return %c0_i32, %c0_i32_0 : i32, i32
  }
  func.func @transform_16(%arg0: i32) -> (i32, i32) {
    %c0_i32 = arith.constant 0 : i32
    %c0_i32_0 = arith.constant 0 : i32
    return %arg0, %c0_i32 : i32, i32
  }
  func.func @transform_17(%arg0: i32) -> (i32, i32) {
    %c0_i32 = arith.constant 0 : i32
    %c0_i32_0 = arith.constant 0 : i32
    return %arg0, %c0_i32 : i32, i32
  }
}

module attributes {stable_mosaic.version = 11 : i64} {
  func.func @cvae_kernel(%arg0: i32, %arg1: memref<8x128xbf16, #tpu.memory_space<vmem>>, %arg2: memref<8x128xbf16, #tpu.memory_space<vmem>>, %arg3: memref<8x128xf32, #tpu.memory_space<vmem>>, %arg4: memref<128x128xbf16, #tpu.memory_space<vmem>>, %arg5: memref<1x128xf32, #tpu.memory_space<vmem>>, %arg6: memref<128x128xbf16, #tpu.memory_space<vmem>>, %arg7: memref<1x128xf32, #tpu.memory_space<vmem>>, %arg8: memref<128x256xbf16, #tpu.memory_space<vmem>>, %arg9: memref<1x256xf32, #tpu.memory_space<vmem>>, %arg10: memref<128x128xbf16, #tpu.memory_space<vmem>>, %arg11: memref<128x128xbf16, #tpu.memory_space<vmem>>, %arg12: memref<1x128xf32, #tpu.memory_space<vmem>>, %arg13: memref<128x128xbf16, #tpu.memory_space<vmem>>, %arg14: memref<1x128xf32, #tpu.memory_space<vmem>>, %arg15: memref<128x128xbf16, #tpu.memory_space<vmem>>, %arg16: memref<1x128xf32, #tpu.memory_space<vmem>>, %arg17: memref<8x128xf32, #tpu.memory_space<vmem>>, %arg18: memref<8x256xf32, #tpu.memory_space<vmem>>) attributes {dimension_semantics = [#tpu.dimension_semantics<parallel>], iteration_bounds = array<i64: 1>, scalar_prefetch = 0 : i64, scratch_operands = 0 : i64, tpu.core_type = #tpu.core_type<tc>, window_params = [{transform_indices = @transform_0, window_bounds = array<i64: 8, 128>}, {transform_indices = @transform_1, window_bounds = array<i64: 8, 128>}, {transform_indices = @transform_2, window_bounds = array<i64: 8, 128>}, {pipeline_mode = #tpu.pipeline_mode<synchronous>, transform_indices = @transform_3, window_bounds = array<i64: 128, 128>}, {pipeline_mode = #tpu.pipeline_mode<synchronous>, transform_indices = @transform_4, window_bounds = array<i64: 1, 128>}, {pipeline_mode = #tpu.pipeline_mode<synchronous>, transform_indices = @transform_5, window_bounds = array<i64: 128, 128>}, {pipeline_mode = #tpu.pipeline_mode<synchronous>, transform_indices = @transform_6, window_bounds = array<i64: 1, 128>}, {pipeline_mode = #tpu.pipeline_mode<synchronous>, transform_indices = @transform_7, window_bounds = array<i64: 128, 256>}, {pipeline_mode = #tpu.pipeline_mode<synchronous>, transform_indices = @transform_8, window_bounds = array<i64: 1, 256>}, {pipeline_mode = #tpu.pipeline_mode<synchronous>, transform_indices = @transform_9, window_bounds = array<i64: 128, 128>}, {pipeline_mode = #tpu.pipeline_mode<synchronous>, transform_indices = @transform_10, window_bounds = array<i64: 128, 128>}, {pipeline_mode = #tpu.pipeline_mode<synchronous>, transform_indices = @transform_11, window_bounds = array<i64: 1, 128>}, {pipeline_mode = #tpu.pipeline_mode<synchronous>, transform_indices = @transform_12, window_bounds = array<i64: 128, 128>}, {pipeline_mode = #tpu.pipeline_mode<synchronous>, transform_indices = @transform_13, window_bounds = array<i64: 1, 128>}, {pipeline_mode = #tpu.pipeline_mode<synchronous>, transform_indices = @transform_14, window_bounds = array<i64: 128, 128>}, {pipeline_mode = #tpu.pipeline_mode<synchronous>, transform_indices = @transform_15, window_bounds = array<i64: 1, 128>}, {transform_indices = @transform_16, window_bounds = array<i64: 8, 128>}, {transform_indices = @transform_17, window_bounds = array<i64: 8, 256>}]} {
    %c0 = arith.constant 0 : index
    %c0_0 = arith.constant 0 : index
    %0 = vector.load %arg1[%c0, %c0_0] : memref<8x128xbf16, #tpu.memory_space<vmem>>, vector<8x128xbf16>
    %c0_1 = arith.constant 0 : index
    %c0_2 = arith.constant 0 : index
    %1 = vector.load %arg2[%c0_1, %c0_2] : memref<8x128xbf16, #tpu.memory_space<vmem>>, vector<8x128xbf16>
    %c0_3 = arith.constant 0 : index
    %c0_4 = arith.constant 0 : index
    %2 = vector.load %arg3[%c0_3, %c0_4] : memref<8x128xf32, #tpu.memory_space<vmem>>, vector<8x128xf32>
    %c0_5 = arith.constant 0 : index
    %c0_6 = arith.constant 0 : index
    %3 = vector.load %arg4[%c0_5, %c0_6] : memref<128x128xbf16, #tpu.memory_space<vmem>>, vector<128x128xbf16>
    %cst = arith.constant dense<0.000000e+00> : vector<8x128xf32>
    %4 = tpu.matmul %0, %3, %cst {dimension_numbers = #tpu.dot_dimension_numbers<[1], [0], [0], [1], [0, 0, 1, 1], [], []>} : vector<8x128xbf16>, vector<128x128xbf16>, vector<8x128xf32> -> vector<8x128xf32>
    %c0_7 = arith.constant 0 : index
    %c0_8 = arith.constant 0 : index
    %5 = vector.load %arg5[%c0_7, %c0_8] : memref<1x128xf32, #tpu.memory_space<vmem>>, vector<1x128xf32>
    %6 = vector.broadcast %5 : vector<1x128xf32> to vector<8x128xf32>
    %7 = arith.addf %4, %6 : vector<8x128xf32>
    %cst_9 = arith.constant 0.000000e+00 : f32
    %8 = vector.broadcast %cst_9 : f32 to vector<8x128xf32>
    %9 = arith.cmpf ogt, %7, %8 : vector<8x128xf32>
    %cst_10 = arith.constant 2.000000e-01 : f32
    %10 = vector.broadcast %cst_10 : f32 to vector<8x128xf32>
    %11 = arith.mulf %10, %7 : vector<8x128xf32>
    %12 = arith.select %9, %7, %11 : vector<8x128xi1>, vector<8x128xf32>
    %13 = arith.truncf %12 : vector<8x128xf32> to vector<8x128xbf16>
    %c0_11 = arith.constant 0 : index
    %c0_12 = arith.constant 0 : index
    %14 = vector.load %arg6[%c0_11, %c0_12] : memref<128x128xbf16, #tpu.memory_space<vmem>>, vector<128x128xbf16>
    %cst_13 = arith.constant dense<0.000000e+00> : vector<8x128xf32>
    %15 = tpu.matmul %13, %14, %cst_13 {dimension_numbers = #tpu.dot_dimension_numbers<[1], [0], [0], [1], [0, 0, 1, 1], [], []>} : vector<8x128xbf16>, vector<128x128xbf16>, vector<8x128xf32> -> vector<8x128xf32>
    %c0_14 = arith.constant 0 : index
    %c0_15 = arith.constant 0 : index
    %16 = vector.load %arg7[%c0_14, %c0_15] : memref<1x128xf32, #tpu.memory_space<vmem>>, vector<1x128xf32>
    %17 = vector.broadcast %16 : vector<1x128xf32> to vector<8x128xf32>
    %18 = arith.addf %15, %17 : vector<8x128xf32>
    %cst_16 = arith.constant 0.000000e+00 : f32
    %19 = vector.broadcast %cst_16 : f32 to vector<8x128xf32>
    %20 = arith.cmpf ogt, %18, %19 : vector<8x128xf32>
    %cst_17 = arith.constant 2.000000e-01 : f32
    %21 = vector.broadcast %cst_17 : f32 to vector<8x128xf32>
    %22 = arith.mulf %21, %18 : vector<8x128xf32>
    %23 = arith.select %20, %18, %22 : vector<8x128xi1>, vector<8x128xf32>
    %24 = arith.truncf %23 : vector<8x128xf32> to vector<8x128xbf16>
    %c0_18 = arith.constant 0 : index
    %c0_19 = arith.constant 0 : index
    %25 = vector.load %arg8[%c0_18, %c0_19] : memref<128x256xbf16, #tpu.memory_space<vmem>>, vector<128x256xbf16>
    %cst_20 = arith.constant dense<0.000000e+00> : vector<8x256xf32>
    %26 = tpu.matmul %24, %25, %cst_20 {dimension_numbers = #tpu.dot_dimension_numbers<[1], [0], [0], [1], [0, 0, 1, 1], [], []>} : vector<8x128xbf16>, vector<128x256xbf16>, vector<8x256xf32> -> vector<8x256xf32>
    %c0_21 = arith.constant 0 : index
    %c0_22 = arith.constant 0 : index
    %27 = vector.load %arg9[%c0_21, %c0_22] : memref<1x256xf32, #tpu.memory_space<vmem>>, vector<1x256xf32>
    %28 = vector.broadcast %27 : vector<1x256xf32> to vector<8x256xf32>
    %29 = arith.addf %26, %28 : vector<8x256xf32>
    %30 = vector.extract_strided_slice %29 {offsets = [0, 0], sizes = [8, 128], strides = [1, 1]} : vector<8x256xf32> to vector<8x128xf32>
    %31 = vector.extract_strided_slice %29 {offsets = [0, 128], sizes = [8, 128], strides = [1, 1]} : vector<8x256xf32> to vector<8x128xf32>
    %cst_23 = arith.constant 5.000000e-01 : f32
    %32 = vector.broadcast %cst_23 : f32 to vector<8x128xf32>
    %33 = arith.mulf %32, %31 : vector<8x128xf32>
    %34 = math.exp %33 : vector<8x128xf32>
    %35 = arith.mulf %34, %2 : vector<8x128xf32>
    %36 = arith.addf %30, %35 : vector<8x128xf32>
    %37 = arith.truncf %36 : vector<8x128xf32> to vector<8x128xbf16>
    %c0_24 = arith.constant 0 : index
    %c0_25 = arith.constant 0 : index
    %38 = vector.load %arg10[%c0_24, %c0_25] : memref<128x128xbf16, #tpu.memory_space<vmem>>, vector<128x128xbf16>
    %cst_26 = arith.constant dense<0.000000e+00> : vector<8x128xf32>
    %39 = tpu.matmul %37, %38, %cst_26 {dimension_numbers = #tpu.dot_dimension_numbers<[1], [0], [0], [1], [0, 0, 1, 1], [], []>} : vector<8x128xbf16>, vector<128x128xbf16>, vector<8x128xf32> -> vector<8x128xf32>
    %c0_27 = arith.constant 0 : index
    %c0_28 = arith.constant 0 : index
    %40 = vector.load %arg11[%c0_27, %c0_28] : memref<128x128xbf16, #tpu.memory_space<vmem>>, vector<128x128xbf16>
    %cst_29 = arith.constant dense<0.000000e+00> : vector<8x128xf32>
    %41 = tpu.matmul %1, %40, %cst_29 {dimension_numbers = #tpu.dot_dimension_numbers<[1], [0], [0], [1], [0, 0, 1, 1], [], []>} : vector<8x128xbf16>, vector<128x128xbf16>, vector<8x128xf32> -> vector<8x128xf32>
    %42 = arith.addf %39, %41 : vector<8x128xf32>
    %c0_30 = arith.constant 0 : index
    %c0_31 = arith.constant 0 : index
    %43 = vector.load %arg12[%c0_30, %c0_31] : memref<1x128xf32, #tpu.memory_space<vmem>>, vector<1x128xf32>
    %44 = vector.broadcast %43 : vector<1x128xf32> to vector<8x128xf32>
    %45 = arith.addf %42, %44 : vector<8x128xf32>
    %cst_32 = arith.constant 0.000000e+00 : f32
    %46 = vector.broadcast %cst_32 : f32 to vector<8x128xf32>
    %47 = arith.cmpf ogt, %45, %46 : vector<8x128xf32>
    %cst_33 = arith.constant 2.000000e-01 : f32
    %48 = vector.broadcast %cst_33 : f32 to vector<8x128xf32>
    %49 = arith.mulf %48, %45 : vector<8x128xf32>
    %50 = arith.select %47, %45, %49 : vector<8x128xi1>, vector<8x128xf32>
    %51 = arith.truncf %50 : vector<8x128xf32> to vector<8x128xbf16>
    %c0_34 = arith.constant 0 : index
    %c0_35 = arith.constant 0 : index
    %52 = vector.load %arg13[%c0_34, %c0_35] : memref<128x128xbf16, #tpu.memory_space<vmem>>, vector<128x128xbf16>
    %cst_36 = arith.constant dense<0.000000e+00> : vector<8x128xf32>
    %53 = tpu.matmul %51, %52, %cst_36 {dimension_numbers = #tpu.dot_dimension_numbers<[1], [0], [0], [1], [0, 0, 1, 1], [], []>} : vector<8x128xbf16>, vector<128x128xbf16>, vector<8x128xf32> -> vector<8x128xf32>
    %c0_37 = arith.constant 0 : index
    %c0_38 = arith.constant 0 : index
    %54 = vector.load %arg14[%c0_37, %c0_38] : memref<1x128xf32, #tpu.memory_space<vmem>>, vector<1x128xf32>
    %55 = vector.broadcast %54 : vector<1x128xf32> to vector<8x128xf32>
    %56 = arith.addf %53, %55 : vector<8x128xf32>
    %cst_39 = arith.constant 0.000000e+00 : f32
    %57 = vector.broadcast %cst_39 : f32 to vector<8x128xf32>
    %58 = arith.cmpf ogt, %56, %57 : vector<8x128xf32>
    %cst_40 = arith.constant 2.000000e-01 : f32
    %59 = vector.broadcast %cst_40 : f32 to vector<8x128xf32>
    %60 = arith.mulf %59, %56 : vector<8x128xf32>
    %61 = arith.select %58, %56, %60 : vector<8x128xi1>, vector<8x128xf32>
    %62 = arith.truncf %61 : vector<8x128xf32> to vector<8x128xbf16>
    %c0_41 = arith.constant 0 : index
    %c0_42 = arith.constant 0 : index
    %63 = vector.load %arg15[%c0_41, %c0_42] : memref<128x128xbf16, #tpu.memory_space<vmem>>, vector<128x128xbf16>
    %cst_43 = arith.constant dense<0.000000e+00> : vector<8x128xf32>
    %64 = tpu.matmul %62, %63, %cst_43 {dimension_numbers = #tpu.dot_dimension_numbers<[1], [0], [0], [1], [0, 0, 1, 1], [], []>} : vector<8x128xbf16>, vector<128x128xbf16>, vector<8x128xf32> -> vector<8x128xf32>
    %c0_44 = arith.constant 0 : index
    %c0_45 = arith.constant 0 : index
    %65 = vector.load %arg16[%c0_44, %c0_45] : memref<1x128xf32, #tpu.memory_space<vmem>>, vector<1x128xf32>
    %66 = vector.broadcast %65 : vector<1x128xf32> to vector<8x128xf32>
    %67 = arith.addf %64, %66 : vector<8x128xf32>
    %c0_46 = arith.constant 0 : index
    %c0_47 = arith.constant 0 : index
    %68 = vector.load %arg17[%c0_46, %c0_47] : memref<8x128xf32, #tpu.memory_space<vmem>>, vector<8x128xf32>
    tpu.vector_store %arg17[%c0_46, %c0_47], %67 {strides = array<i32>} : memref<8x128xf32, #tpu.memory_space<vmem>>, vector<8x128xf32>,
    %c0_48 = arith.constant 0 : index
    %c0_49 = arith.constant 0 : index
    %69 = vector.load %arg18[%c0_48, %c0_49] : memref<8x256xf32, #tpu.memory_space<vmem>>, vector<8x256xf32>
    tpu.vector_store %arg18[%c0_48, %c0_49], %29 {strides = array<i32>} : memref<8x256xf32, #tpu.memory_space<vmem>>, vector<8x256xf32>,
    return
  }
  func.func @transform_0(%arg0: i32) -> (i32, i32) {
    %c0_i32 = arith.constant 0 : i32
    %c0_i32_0 = arith.constant 0 : i32
    return %arg0, %c0_i32 : i32, i32
  }
  func.func @transform_1(%arg0: i32) -> (i32, i32) {
    %c0_i32 = arith.constant 0 : i32
    %c0_i32_0 = arith.constant 0 : i32
    return %arg0, %c0_i32 : i32, i32
  }
  func.func @transform_2(%arg0: i32) -> (i32, i32) {
    %c0_i32 = arith.constant 0 : i32
    %c0_i32_0 = arith.constant 0 : i32
    return %arg0, %c0_i32 : i32, i32
  }
  func.func @transform_3(%arg0: i32) -> (i32, i32) {
    %c0_i32 = arith.constant 0 : i32
    %c0_i32_0 = arith.constant 0 : i32
    %c0_i32_1 = arith.constant 0 : i32
    return %c0_i32, %c0_i32_0 : i32, i32
  }
  func.func @transform_4(%arg0: i32) -> (i32, i32) {
    %c0_i32 = arith.constant 0 : i32
    %c0_i32_0 = arith.constant 0 : i32
    %c0_i32_1 = arith.constant 0 : i32
    return %c0_i32, %c0_i32_0 : i32, i32
  }
  func.func @transform_5(%arg0: i32) -> (i32, i32) {
    %c0_i32 = arith.constant 0 : i32
    %c0_i32_0 = arith.constant 0 : i32
    %c0_i32_1 = arith.constant 0 : i32
    return %c0_i32, %c0_i32_0 : i32, i32
  }
  func.func @transform_6(%arg0: i32) -> (i32, i32) {
    %c0_i32 = arith.constant 0 : i32
    %c0_i32_0 = arith.constant 0 : i32
    %c0_i32_1 = arith.constant 0 : i32
    return %c0_i32, %c0_i32_0 : i32, i32
  }
  func.func @transform_7(%arg0: i32) -> (i32, i32) {
    %c0_i32 = arith.constant 0 : i32
    %c0_i32_0 = arith.constant 0 : i32
    %c0_i32_1 = arith.constant 0 : i32
    return %c0_i32, %c0_i32_0 : i32, i32
  }
  func.func @transform_8(%arg0: i32) -> (i32, i32) {
    %c0_i32 = arith.constant 0 : i32
    %c0_i32_0 = arith.constant 0 : i32
    %c0_i32_1 = arith.constant 0 : i32
    return %c0_i32, %c0_i32_0 : i32, i32
  }
  func.func @transform_9(%arg0: i32) -> (i32, i32) {
    %c0_i32 = arith.constant 0 : i32
    %c0_i32_0 = arith.constant 0 : i32
    %c0_i32_1 = arith.constant 0 : i32
    return %c0_i32, %c0_i32_0 : i32, i32
  }
  func.func @transform_10(%arg0: i32) -> (i32, i32) {
    %c0_i32 = arith.constant 0 : i32
    %c0_i32_0 = arith.constant 0 : i32
    %c0_i32_1 = arith.constant 0 : i32
    return %c0_i32, %c0_i32_0 : i32, i32
  }
  func.func @transform_11(%arg0: i32) -> (i32, i32) {
    %c0_i32 = arith.constant 0 : i32
    %c0_i32_0 = arith.constant 0 : i32
    %c0_i32_1 = arith.constant 0 : i32
    return %c0_i32, %c0_i32_0 : i32, i32
  }
  func.func @transform_12(%arg0: i32) -> (i32, i32) {
    %c0_i32 = arith.constant 0 : i32
    %c0_i32_0 = arith.constant 0 : i32
    %c0_i32_1 = arith.constant 0 : i32
    return %c0_i32, %c0_i32_0 : i32, i32
  }
  func.func @transform_13(%arg0: i32) -> (i32, i32) {
    %c0_i32 = arith.constant 0 : i32
    %c0_i32_0 = arith.constant 0 : i32
    %c0_i32_1 = arith.constant 0 : i32
    return %c0_i32, %c0_i32_0 : i32, i32
  }
  func.func @transform_14(%arg0: i32) -> (i32, i32) {
    %c0_i32 = arith.constant 0 : i32
    %c0_i32_0 = arith.constant 0 : i32
    %c0_i32_1 = arith.constant 0 : i32
    return %c0_i32, %c0_i32_0 : i32, i32
  }
  func.func @transform_15(%arg0: i32) -> (i32, i32) {
    %c0_i32 = arith.constant 0 : i32
    %c0_i32_0 = arith.constant 0 : i32
    %c0_i32_1 = arith.constant 0 : i32
    return %c0_i32, %c0_i32_0 : i32, i32
  }
  func.func @transform_16(%arg0: i32) -> (i32, i32) {
    %c0_i32 = arith.constant 0 : i32
    %c0_i32_0 = arith.constant 0 : i32
    return %arg0, %c0_i32 : i32, i32
  }
  func.func @transform_17(%arg0: i32) -> (i32, i32) {
    %c0_i32 = arith.constant 0 : i32
    %c0_i32_0 = arith.constant 0 : i32
    return %arg0, %c0_i32 : i32, i32
  }
}

</mosaic_0001>

<llo_original>
// kernel: tpu_custom_call.1
$region0: #{tpu_custom_call.1}
  #allocation0 [shape = 'u32[]', space=smem, size = 0x4, offset = 0x4, fixed_abs, tag = 'smem constant byte address 0x4 - core index']
  #allocation1 [shape = 'u32[144,128]{1,0:T(1,128)}', space=vmem, size = 0x12000, scoped, tag = 'internal scratch']
  %s0 = inlined_call_operand.hbm [shape: bf16[8,128], index: 0, kind: input, shape index: {}]
  %s1 = inlined_call_operand.hbm [shape: bf16[8,128], index: 1, kind: input, shape index: {}]
  %s2 = inlined_call_operand.hbm [shape: f32[8,128], index: 2, kind: input, shape index: {}]
  %s3 = inlined_call_operand.hbm [shape: bf16[128,128], index: 3, kind: input, shape index: {}]
  %s4 = inlined_call_operand.vmem [shape: f32[1,128], index: 4, kind: input, shape index: {}]
  %s5 = inlined_call_operand.hbm [shape: bf16[128,128], index: 5, kind: input, shape index: {}]
  %s6 = inlined_call_operand.vmem [shape: f32[1,128], index: 6, kind: input, shape index: {}]
  %s7 = inlined_call_operand.hbm [shape: bf16[128,256], index: 7, kind: input, shape index: {}]
  %s8 = inlined_call_operand.vmem [shape: f32[1,256], index: 8, kind: input, shape index: {}]
  %s9 = inlined_call_operand.hbm [shape: bf16[128,128], index: 9, kind: input, shape index: {}]
  %s10 = inlined_call_operand.hbm [shape: bf16[128,128], index: 10, kind: input, shape index: {}]
  %s11 = inlined_call_operand.vmem [shape: f32[1,128], index: 11, kind: input, shape index: {}]
  %s12 = inlined_call_operand.hbm [shape: bf16[128,128], index: 12, kind: input, shape index: {}]
  %s13 = inlined_call_operand.vmem [shape: f32[1,128], index: 13, kind: input, shape index: {}]
  %s14 = inlined_call_operand.hbm [shape: bf16[128,128], index: 14, kind: input, shape index: {}]
  %s15 = inlined_call_operand.vmem [shape: f32[1,128], index: 15, kind: input, shape index: {}]
  %s16 = inlined_call_operand.hbm [shape: f32[8,128], index: 16, kind: output, shape index: {0}]
  %s17 = inlined_call_operand.hbm [shape: f32[8,256], index: 17, kind: output, shape index: {1}]
  %18 = xla_tuple %s16, %s17
  %s19 = sld [smem:[#allocation0]]
  $region122: #{tpu_custom_call.1} parent=0
    _
  %s21 = ssub.s32 1, %s19
  %s22 = scalar_select 0, %s21, %s19
  $region1: #{tpu_custom_call.1} parent=0
    #allocation2 [shape = 'u8[2048]{0}', space=vmem, size = 0x800, scoped, tag = 'input window, operand 0, single buffered']
    #allocation3 [shape = 's32[1]{0}', space=sflag, size = 0x4, scoped, tag = 'scoped memory for tpu_custom_call.1']
    #allocation4 [shape = 's32[1]{0}', space=sflag, size = 0x4, scoped, tag = 'scoped memory for tpu_custom_call.1']
    #allocation5 [shape = 'u8[2048]{0}', space=vmem, size = 0x800, scoped, tag = 'input window, operand 1, single buffered']
    #allocation6 [shape = 's32[1]{0}', space=sflag, size = 0x4, scoped, tag = 'scoped memory for tpu_custom_call.1']
    #allocation7 [shape = 'u8[4096]{0}', space=vmem, size = 0x1000, scoped, tag = 'input window, operand 2, single buffered']
    #allocation8 [shape = 'u8[32768]{0}', space=vmem, size = 0x8000, scoped, tag = 'input window, operand 3, single buffered']
    #allocation9 [shape = 's32[1]{0}', space=sflag, size = 0x4, scoped, tag = 'scoped memory for tpu_custom_call.1']
    #allocation10 [shape = 'u8[32768]{0}', space=vmem, size = 0x8000, scoped, tag = 'input window, operand 5, single buffered']
    #allocation11 [shape = 'u8[65536]{0}', space=vmem, size = 0x10000, scoped, tag = 'input window, operand 7, single buffered']
    #allocation12 [shape = 's32[1]{0}', space=sflag, size = 0x4, scoped, tag = 'scoped memory for tpu_custom_call.1']
    #allocation13 [shape = 'u8[32768]{0}', space=vmem, size = 0x8000, scoped, tag = 'input window, operand 9, single buffered']
    #allocation14 [shape = 'u8[32768]{0}', space=vmem, size = 0x8000, scoped, tag = 'input window, operand 10, single buffered']
    #allocation15 [shape = 's32[1]{0}', space=sflag, size = 0x4, scoped, tag = 'scoped memory for tpu_custom_call.1']
    #allocation16 [shape = 'u8[32768]{0}', space=vmem, size = 0x8000, scoped, tag = 'input window, operand 12, single buffered']
    #allocation17 [shape = 'u8[32768]{0}', space=vmem, size = 0x8000, scoped, tag = 'input window, operand 14, single buffered']
    #allocation18 [shape = 's32[1]{0}', space=sflag, size = 0x4, scoped, tag = 'scoped memory for tpu_custom_call.1']
    #allocation19 [shape = 'u8[4096]{0}', space=vmem, size = 0x1000, scoped, tag = 'output window, operand 0, single buffered']
    #allocation20 [shape = 'u8[8192]{0}', space=vmem, size = 0x2000, scoped, tag = 'output window, operand 1, single buffered']
    #allocation21 [shape = 's32[1]{0}', space=sflag, size = 0x4, scoped, tag = 'scoped memory for tpu_custom_call.1']
    %23 = vsyncpa [#allocation3], 0
    %24 = vsyncpa [#allocation6], 0
    %25 = vsyncpa [#allocation9], 0
    %26 = vsyncpa [#allocation12], 0
    %27 = vsyncpa [#allocation15], 0
    %28 = vsyncpa [#allocation18], 0
    %29 = vsyncpa [#allocation4], 0
    %30 = vsyncpa [#allocation21], 0
    // Predicated region
    $region2: #{tpu_custom_call.1} parent=1 // pred_check
      _
    $region3: #{tpu_custom_call.1} parent=1 // pred_check_branch
      %32 = sbr.rel (0) target = $region5
    $region4: #{tpu_custom_call.1} parent=1 // pred_region
      %s34 = ssub.s32 64, 64
      %35 = vsyncadd [#allocation3], %s34
      %s37 = sshll.u32 [#allocation2], 4
      %s38 = int_to_ptr.vmem [resolvable:$true] %s37
      %40 = dma.hbm_to_vmem [thread:$0]  %s0, 64, %s38, [#allocation3]
    $region5: #{tpu_custom_call.1} parent=1 // pred_fallthru
      _
    // Predicated region
    $region6: #{tpu_custom_call.1} parent=1 // pred_check
      _
    $region7: #{tpu_custom_call.1} parent=1 // pred_check_branch
      %42 = sbr.rel (0) target = $region9
    $region8: #{tpu_custom_call.1} parent=1 // pred_region
      %s44 = ssub.s32 64, 64
      %45 = vsyncadd [#allocation6], %s44
      %s47 = sshll.u32 [#allocation5], 4
      %s48 = int_to_ptr.vmem [resolvable:$true] %s47
      %50 = dma.hbm_to_vmem [thread:$0]  %s1, 64, %s48, [#allocation6]
    $region9: #{tpu_custom_call.1} parent=1 // pred_fallthru
      _
    // Predicated region
    $region10: #{tpu_custom_call.1} parent=1 // pred_check
      _
    $region11: #{tpu_custom_call.1} parent=1 // pred_check_branch
      %52 = sbr.rel (0) target = $region13
    $region12: #{tpu_custom_call.1} parent=1 // pred_region
      %s54 = ssub.s32 128, 128
      %55 = vsyncadd [#allocation6], %s54
      %s57 = sshll.u32 [#allocation7], 4
      %s58 = int_to_ptr.vmem [resolvable:$true] %s57
      %60 = dma.hbm_to_vmem [thread:$0]  %s2, 128, %s58, [#allocation6]
    $region13: #{tpu_custom_call.1} parent=1 // pred_fallthru
      _
    // Predicated region
    $region14: #{tpu_custom_call.1} parent=1 // pred_check
      _
    $region15: #{tpu_custom_call.1} parent=1 // pred_check_branch
      %62 = sbr.rel (0) target = $region17
    $region16: #{tpu_custom_call.1} parent=1 // pred_region
      %s64 = ssub.s32 1024, 1024
      %65 = vsyncadd [#allocation9], %s64
      %s66 = sshll.u32 [#allocation8], 4
      %s67 = int_to_ptr.vmem [resolvable:$true] %s66
      %72 = dma.hbm_to_vmem [thread:$0]  %s3, 1024, %s67, [#allocation9], 64, 64, 4
    $region17: #{tpu_custom_call.1} parent=1 // pred_fallthru
      _
    // Predicated region
    $region18: #{tpu_custom_call.1} parent=1 // pred_check
      _
    $region19: #{tpu_custom_call.1} parent=1 // pred_check_branch
      %74 = sbr.rel (0) target = $region21
    $region20: #{tpu_custom_call.1} parent=1 // pred_region
      _
    $region21: #{tpu_custom_call.1} parent=1 // pred_fallthru
      _
    // Predicated region
    $region22: #{tpu_custom_call.1} parent=1 // pred_check
      _
    $region23: #{tpu_custom_call.1} parent=1 // pred_check_branch
      %76 = sbr.rel (0) target = $region25
    $region24: #{tpu_custom_call.1} parent=1 // pred_region
      %s78 = ssub.s32 1024, 1024
      %79 = vsyncadd [#allocation9], %s78
      %s80 = sshll.u32 [#allocation10], 4
      %s81 = int_to_ptr.vmem [resolvable:$true] %s80
      %86 = dma.hbm_to_vmem [thread:$0]  %s5, 1024, %s81, [#allocation9], 64, 64, 4
    $region25: #{tpu_custom_call.1} parent=1 // pred_fallthru
      _
    // Predicated region
    $region26: #{tpu_custom_call.1} parent=1 // pred_check
      _
    $region27: #{tpu_custom_call.1} parent=1 // pred_check_branch
      %88 = sbr.rel (0) target = $region29
    $region28: #{tpu_custom_call.1} parent=1 // pred_region
      _
    $region29: #{tpu_custom_call.1} parent=1 // pred_fallthru
      _
    // Predicated region
    $region30: #{tpu_custom_call.1} parent=1 // pred_check
      _
    $region31: #{tpu_custom_call.1} parent=1 // pred_check_branch
      %90 = sbr.rel (0) target = $region33
    $region32: #{tpu_custom_call.1} parent=1 // pred_region
      %s92 = ssub.s32 2048, 2048
      %93 = vsyncadd [#allocation12], %s92
      %s94 = sshll.u32 [#allocation11], 4
      %s95 = int_to_ptr.vmem [resolvable:$true] %s94
      %100 = dma.hbm_to_vmem [thread:$0]  %s7, 2048, %s95, [#allocation12], 128, 128, 8
    $region33: #{tpu_custom_call.1} parent=1 // pred_fallthru
      _
    // Predicated region
    $region34: #{tpu_custom_call.1} parent=1 // pred_check
      _
    $region35: #{tpu_custom_call.1} parent=1 // pred_check_branch
      %102 = sbr.rel (0) target = $region37
    $region36: #{tpu_custom_call.1} parent=1 // pred_region
      _
    $region37: #{tpu_custom_call.1} parent=1 // pred_fallthru
      _
    // Predicated region
    $region38: #{tpu_custom_call.1} parent=1 // pred_check
      _
    $region39: #{tpu_custom_call.1} parent=1 // pred_check_branch
      %104 = sbr.rel (0) target = $region41
    $region40: #{tpu_custom_call.1} parent=1 // pred_region
      %s106 = ssub.s32 1024, 1024
      %107 = vsyncadd [#allocation12], %s106
      %s108 = sshll.u32 [#allocation13], 4
      %s109 = int_to_ptr.vmem [resolvable:$true] %s108
      %114 = dma.hbm_to_vmem [thread:$0]  %s9, 1024, %s109, [#allocation12], 64, 64, 4
    $region41: #{tpu_custom_call.1} parent=1 // pred_fallthru
      _
    // Predicated region
    $region42: #{tpu_custom_call.1} parent=1 // pred_check
      _
    $region43: #{tpu_custom_call.1} parent=1 // pred_check_branch
      %116 = sbr.rel (0) target = $region45
    $region44: #{tpu_custom_call.1} parent=1 // pred_region
      %s118 = ssub.s32 1024, 1024
      %119 = vsyncadd [#allocation15], %s118
      %s120 = sshll.u32 [#allocation14], 4
      %s121 = int_to_ptr.vmem [resolvable:$true] %s120
      %126 = dma.hbm_to_vmem [thread:$0]  %s10, 1024, %s121, [#allocation15], 64, 64, 4
    $region45: #{tpu_custom_call.1} parent=1 // pred_fallthru
      _
    // Predicated region
    $region46: #{tpu_custom_call.1} parent=1 // pred_check
      _
    $region47: #{tpu_custom_call.1} parent=1 // pred_check_branch
      %128 = sbr.rel (0) target = $region49
    $region48: #{tpu_custom_call.1} parent=1 // pred_region
      _
    $region49: #{tpu_custom_call.1} parent=1 // pred_fallthru
      _
    // Predicated region
    $region50: #{tpu_custom_call.1} parent=1 // pred_check
      _
    $region51: #{tpu_custom_call.1} parent=1 // pred_check_branch
      %130 = sbr.rel (0) target = $region53
    $region52: #{tpu_custom_call.1} parent=1 // pred_region
      %s132 = ssub.s32 1024, 1024
      %133 = vsyncadd [#allocation15], %s132
      %s134 = sshll.u32 [#allocation16], 4
      %s135 = int_to_ptr.vmem [resolvable:$true] %s134
      %140 = dma.hbm_to_vmem [thread:$0]  %s12, 1024, %s135, [#allocation15], 64, 64, 4
    $region53: #{tpu_custom_call.1} parent=1 // pred_fallthru
      _
    // Predicated region
    $region54: #{tpu_custom_call.1} parent=1 // pred_check
      _
    $region55: #{tpu_custom_call.1} parent=1 // pred_check_branch
      %142 = sbr.rel (0) target = $region57
    $region56: #{tpu_custom_call.1} parent=1 // pred_region
      _
    $region57: #{tpu_custom_call.1} parent=1 // pred_fallthru
      _
    // Predicated region
    $region58: #{tpu_custom_call.1} parent=1 // pred_check
      _
    $region59: #{tpu_custom_call.1} parent=1 // pred_check_branch
      %144 = sbr.rel (0) target = $region61
    $region60: #{tpu_custom_call.1} parent=1 // pred_region
      %s146 = ssub.s32 1024, 1024
      %147 = vsyncadd [#allocation18], %s146
      %s148 = sshll.u32 [#allocation17], 4
      %s149 = int_to_ptr.vmem [resolvable:$true] %s148
      %154 = dma.hbm_to_vmem [thread:$0]  %s14, 1024, %s149, [#allocation18], 64, 64, 4
    $region61: #{tpu_custom_call.1} parent=1 // pred_fallthru
      _
    // Predicated region
    $region62: #{tpu_custom_call.1} parent=1 // pred_check
      _
    $region63: #{tpu_custom_call.1} parent=1 // pred_check_branch
      %156 = sbr.rel (0) target = $region65
    $region64: #{tpu_custom_call.1} parent=1 // pred_region
      _
    $region65: #{tpu_custom_call.1} parent=1 // pred_fallthru
      _
    // Predicated region
    $region66: #{tpu_custom_call.1} parent=1 // pred_check
      _
    $region67: #{tpu_custom_call.1} parent=1 // pred_check_branch
      %158 = sbr.rel (0) target = $region69
    $region68: #{tpu_custom_call.1} parent=1 // pred_region
      %159 = dma.done [#allocation3], 64
    $region69: #{tpu_custom_call.1} parent=1 // pred_fallthru
      _
    // Predicated region
    $region70: #{tpu_custom_call.1} parent=1 // pred_check
      _
    $region71: #{tpu_custom_call.1} parent=1 // pred_check_branch
      %161 = sbr.rel (0) target = $region73
    $region72: #{tpu_custom_call.1} parent=1 // pred_region
      %162 = dma.done [#allocation6], 64
    $region73: #{tpu_custom_call.1} parent=1 // pred_fallthru
      _
    // Predicated region
    $region74: #{tpu_custom_call.1} parent=1 // pred_check
      _
    $region75: #{tpu_custom_call.1} parent=1 // pred_check_branch
      %164 = sbr.rel (0) target = $region77
    $region76: #{tpu_custom_call.1} parent=1 // pred_region
      %165 = dma.done [#allocation6], 128
    $region77: #{tpu_custom_call.1} parent=1 // pred_fallthru
      _
    // Predicated region
    $region78: #{tpu_custom_call.1} parent=1 // pred_check
      _
    $region79: #{tpu_custom_call.1} parent=1 // pred_check_branch
      %167 = sbr.rel (0) target = $region81
    $region80: #{tpu_custom_call.1} parent=1 // pred_region
      %168 = dma.done [#allocation9], 1024
    $region81: #{tpu_custom_call.1} parent=1 // pred_fallthru
      _
    // Predicated region
    $region82: #{tpu_custom_call.1} parent=1 // pred_check
      _
    $region83: #{tpu_custom_call.1} parent=1 // pred_check_branch
      %170 = sbr.rel (0) target = $region85
    $region84: #{tpu_custom_call.1} parent=1 // pred_region
      %171 = dma.done [#allocation9], 1024
    $region85: #{tpu_custom_call.1} parent=1 // pred_fallthru
      _
    // Predicated region
    $region86: #{tpu_custom_call.1} parent=1 // pred_check
      _
    $region87: #{tpu_custom_call.1} parent=1 // pred_check_branch
      %173 = sbr.rel (0) target = $region89
    $region88: #{tpu_custom_call.1} parent=1 // pred_region
      %174 = dma.done [#allocation12], 2048
    $region89: #{tpu_custom_call.1} parent=1 // pred_fallthru
      _
    // Predicated region
    $region90: #{tpu_custom_call.1} parent=1 // pred_check
      _
    $region91: #{tpu_custom_call.1} parent=1 // pred_check_branch
      %176 = sbr.rel (0) target = $region93
    $region92: #{tpu_custom_call.1} parent=1 // pred_region
      %177 = dma.done [#allocation12], 1024
    $region93: #{tpu_custom_call.1} parent=1 // pred_fallthru
      _
    // Predicated region
    $region94: #{tpu_custom_call.1} parent=1 // pred_check
      _
    $region95: #{tpu_custom_call.1} parent=1 // pred_check_branch
      %179 = sbr.rel (0) target = $region97
    $region96: #{tpu_custom_call.1} parent=1 // pred_region
      %180 = dma.done [#allocation15], 1024
    $region97: #{tpu_custom_call.1} parent=1 // pred_fallthru
      _
    // Predicated region
    $region98: #{tpu_custom_call.1} parent=1 // pred_check
      _
    $region99: #{tpu_custom_call.1} parent=1 // pred_check_branch
      %182 = sbr.rel (0) target = $region101
    $region100: #{tpu_custom_call.1} parent=1 // pred_region
      %183 = dma.done [#allocation15], 1024
    $region101: #{tpu_custom_call.1} parent=1 // pred_fallthru
      _
    // Predicated region
    $region102: #{tpu_custom_call.1} parent=1 // pred_check
      _
    $region103: #{tpu_custom_call.1} parent=1 // pred_check_branch
      %185 = sbr.rel (0) target = $region105
    $region104: #{tpu_custom_call.1} parent=1 // pred_region
      %186 = dma.done [#allocation18], 1024
    $region105: #{tpu_custom_call.1} parent=1 // pred_fallthru
      _
    %v188 = vld [vmem:[#allocation2] sm:$0xf]
    %v189 = vld [vmem:[#allocation5] sm:$0xf]
    %v190 = vld [vmem:[#allocation7] sm:$0xff]
    %v191 = vld [vmem:[#allocation8] sm:$0xf]
    %v192 = vld [vmem:[#allocation8 + $0x4] sm:$0xf]
    %v193 = vld [vmem:[#allocation8 + $0x8] sm:$0xf]
    %v194 = vld [vmem:[#allocation8 + $0xc] sm:$0xf]
    %v195 = vld [vmem:[#allocation8 + $0x10] sm:$0xf]
    %v196 = vld [vmem:[#allocation8 + $0x14] sm:$0xf]
    %v197 = vld [vmem:[#allocation8 + $0x18] sm:$0xf]
    %v198 = vld [vmem:[#allocation8 + $0x1c] sm:$0xf]
    %v199 = vld [vmem:[#allocation8 + $0x20] sm:$0xf]
    %v200 = vld [vmem:[#allocation8 + $0x24] sm:$0xf]
    %v201 = vld [vmem:[#allocation8 + $0x28] sm:$0xf]
    %v202 = vld [vmem:[#allocation8 + $0x2c] sm:$0xf]
    %v203 = vld [vmem:[#allocation8 + $0x30] sm:$0xf]
    %v204 = vld [vmem:[#allocation8 + $0x34] sm:$0xf]
    %v205 = vld [vmem:[#allocation8 + $0x38] sm:$0xf]
    %v206 = vld [vmem:[#allocation8 + $0x3c] sm:$0xf]
    %v207 = vld [vmem:[%s4] sm:$0x1]
    %v209 = vlaneseq
    %v210 = vshrl.u32 %v209, 7
    %v211 = vsub.s32 0, %v210
    %v212 = vrot.slane %v207, %v211
    %v230 = vunpack.c.l.b16 %v191
    %v231 = vunpack.c.l.b16 %v192
    %v232 = vunpack.c.l.b16 %v193
    %v233 = vunpack.c.l.b16 %v194
    %v234 = vunpack.c.l.b16 %v195
    %v235 = vunpack.c.l.b16 %v196
    %v236 = vunpack.c.l.b16 %v197
    %v237 = vunpack.c.l.b16 %v198
    %v238 = vunpack.c.l.b16 %v199
    %v239 = vunpack.c.l.b16 %v200
    %v240 = vunpack.c.l.b16 %v201
    %v241 = vunpack.c.l.b16 %v202
    %v242 = vunpack.c.l.b16 %v203
    %v243 = vunpack.c.l.b16 %v204
    %v244 = vunpack.c.l.b16 %v205
    %v245 = vunpack.c.l.b16 %v206
    %v246 = vpack.c.b16 %v231, %v230
    %v247 = vpack.c.b16 %v233, %v232
    %v248 = vpack.c.b16 %v235, %v234
    %v249 = vpack.c.b16 %v237, %v236
    %v250 = vpack.c.b16 %v239, %v238
    %v251 = vpack.c.b16 %v241, %v240
    %v252 = vpack.c.b16 %v243, %v242
    %v253 = vpack.c.b16 %v245, %v244
    %262 = vmatprep.subr.bf16.mxu0 0
    %263 = vmatpush1.bf16.msra.mxu0 %v253
    %264 = vmatprep.subr.bf16.mxu0 0
    %265 = vmatpush1.bf16.msra.mxu0 %v252
    %266 = vmatprep.subr.bf16.mxu0 0
    %267 = vmatpush1.bf16.msra.mxu0 %v251
    %268 = vmatprep.subr.bf16.mxu0 0
    %269 = vmatpush1.bf16.msra.mxu0 %v250
    %270 = vmatprep.subr.bf16.mxu0 0
    %271 = vmatpush1.bf16.msra.mxu0 %v249
    %272 = vmatprep.subr.bf16.mxu0 0
    %273 = vmatpush1.bf16.msra.mxu0 %v248
    %274 = vmatprep.subr.bf16.mxu0 0
    %275 = vmatpush1.bf16.msra.mxu0 %v247
    %276 = vmatprep.subr.bf16.mxu0 0
    %277 = vmatpush1.bf16.msra.mxu0 %v246
    %278 = vmatprep.subr.bf16.mxu0 0
    %279 = vmatpush2.bf16.msra.mxu0 0
    %280 = vmatprep.subr.bf16.mxu0 0
    %281 = vmatpush2.bf16.msra.mxu0 0
    %282 = vmatprep.subr.bf16.mxu0 0
    %283 = vmatpush2.bf16.msra.mxu0 0
    %284 = vmatprep.subr.bf16.mxu0 0
    %285 = vmatpush2.bf16.msra.mxu0 0
    %286 = vmatprep.subr.bf16.mxu0 0
    %287 = vmatpush2.bf16.msra.mxu0 0
    %288 = vmatprep.subr.bf16.mxu0 0
    %289 = vmatpush2.bf16.msra.mxu0 0
    %290 = vmatprep.subr.bf16.mxu0 0
    %291 = vmatpush2.bf16.msra.mxu0 0
    %292 = vmatprep.subr.bf16.mxu0 0
    %293 = vmatpush2.bf16.msra.mxu0 0
    %294 = vmatprep.mubr.bf16.mxu0 0
    %295 = vmatmul.mubr.bf16.gmra.mxu0 %v188
    %v296 = vpop.f32.mrf.mxu0
    %v297 = vadd.f32 %v212, %v296
    %v298 = vpop.f32.mrf.mxu0
    %v299 = vpop.f32.mrf.mxu0
    %v300 = vpop.f32.mrf.mxu0
    %301 = vdwg.mxu0
    %vm302 = vcmp.gt.f32.partialorder %v297, 0.0
    %v303 = vmul.f32 %v297, 0.2
    %v304 = vsel %vm302, %v297, %v303
    %v305 = vpack.c.bf16 %v304, %v304
    %v306 = vld [vmem:[#allocation10] sm:$0xf]
    %v307 = vld [vmem:[#allocation10 + $0x4] sm:$0xf]
    %v308 = vld [vmem:[#allocation10 + $0x8] sm:$0xf]
    %v309 = vld [vmem:[#allocation10 + $0xc] sm:$0xf]
    %v310 = vld [vmem:[#allocation10 + $0x10] sm:$0xf]
    %v311 = vld [vmem:[#allocation10 + $0x14] sm:$0xf]
    %v312 = vld [vmem:[#allocation10 + $0x18] sm:$0xf]
    %v313 = vld [vmem:[#allocation10 + $0x1c] sm:$0xf]
    %v314 = vld [vmem:[#allocation10 + $0x20] sm:$0xf]
    %v315 = vld [vmem:[#allocation10 + $0x24] sm:$0xf]
    %v316 = vld [vmem:[#allocation10 + $0x28] sm:$0xf]
    %v317 = vld [vmem:[#allocation10 + $0x2c] sm:$0xf]
    %v318 = vld [vmem:[#allocation10 + $0x30] sm:$0xf]
    %v319 = vld [vmem:[#allocation10 + $0x34] sm:$0xf]
    %v320 = vld [vmem:[#allocation10 + $0x38] sm:$0xf]
    %v321 = vld [vmem:[#allocation10 + $0x3c] sm:$0xf]
    %v322 = vld [vmem:[%s6] sm:$0x1]
    %v324 = vlaneseq
    %v325 = vshrl.u32 %v324, 7
    %v326 = vsub.s32 0, %v325
    %v327 = vrot.slane %v322, %v326
    %v345 = vunpack.c.l.b16 %v306
    %v346 = vunpack.c.l.b16 %v307
    %v347 = vunpack.c.l.b16 %v308
    %v348 = vunpack.c.l.b16 %v309
    %v349 = vunpack.c.l.b16 %v310
    %v350 = vunpack.c.l.b16 %v311
    %v351 = vunpack.c.l.b16 %v312
    %v352 = vunpack.c.l.b16 %v313
    %v353 = vunpack.c.l.b16 %v314
    %v354 = vunpack.c.l.b16 %v315
    %v355 = vunpack.c.l.b16 %v316
    %v356 = vunpack.c.l.b16 %v317
    %v357 = vunpack.c.l.b16 %v318
    %v358 = vunpack.c.l.b16 %v319
    %v359 = vunpack.c.l.b16 %v320
    %v360 = vunpack.c.l.b16 %v321
    %v361 = vpack.c.b16 %v346, %v345
    %v362 = vpack.c.b16 %v348, %v347
    %v363 = vpack.c.b16 %v350, %v349
    %v364 = vpack.c.b16 %v352, %v351
    %v365 = vpack.c.b16 %v354, %v353
    %v366 = vpack.c.b16 %v356, %v355
    %v367 = vpack.c.b16 %v358, %v357
    %v368 = vpack.c.b16 %v360, %v359
    %377 = vmatprep.subr.bf16.mxu0 0
    %378 = vmatpush1.bf16.msra.mxu0 %v368
    %379 = vmatprep.subr.bf16.mxu0 0
    %380 = vmatpush1.bf16.msra.mxu0 %v367
    %381 = vmatprep.subr.bf16.mxu0 0
    %382 = vmatpush1.bf16.msra.mxu0 %v366
    %383 = vmatprep.subr.bf16.mxu0 0
    %384 = vmatpush1.bf16.msra.mxu0 %v365
    %385 = vmatprep.subr.bf16.mxu0 0
    %386 = vmatpush1.bf16.msra.mxu0 %v364
    %387 = vmatprep.subr.bf16.mxu0 0
    %388 = vmatpush1.bf16.msra.mxu0 %v363
    %389 = vmatprep.subr.bf16.mxu0 0
    %390 = vmatpush1.bf16.msra.mxu0 %v362
    %391 = vmatprep.subr.bf16.mxu0 0
    %392 = vmatpush1.bf16.msra.mxu0 %v361
    %393 = vmatprep.subr.bf16.mxu0 0
    %394 = vmatpush2.bf16.msra.mxu0 0
    %395 = vmatprep.subr.bf16.mxu0 0
    %396 = vmatpush2.bf16.msra.mxu0 0
    %397 = vmatprep.subr.bf16.mxu0 0
    %398 = vmatpush2.bf16.msra.mxu0 0
    %399 = vmatprep.subr.bf16.mxu0 0
    %400 = vmatpush2.bf16.msra.mxu0 0
    %401 = vmatprep.subr.bf16.mxu0 0
    %402 = vmatpush2.bf16.msra.mxu0 0
    %403 = vmatprep.subr.bf16.mxu0 0
    %404 = vmatpush2.bf16.msra.mxu0 0
    %405 = vmatprep.subr.bf16.mxu0 0
    %406 = vmatpush2.bf16.msra.mxu0 0
    %407 = vmatprep.subr.bf16.mxu0 0
    %408 = vmatpush2.bf16.msra.mxu0 0
    %409 = vmatprep.mubr.bf16.mxu0 0
    %410 = vmatmul.mubr.bf16.gmra.mxu0 %v305
    %v411 = vpop.f32.mrf.mxu0
    %v412 = vadd.f32 %v327, %v411
    %v413 = vpop.f32.mrf.mxu0
    %v414 = vpop.f32.mrf.mxu0
    %v415 = vpop.f32.mrf.mxu0
    %416 = vdwg.mxu0
    %vm417 = vcmp.gt.f32.partialorder %v412, 0.0
    %v418 = vmul.f32 %v412, 0.2
    %v419 = vsel %vm417, %v412, %v418
    %v420 = vpack.c.bf16 %v419, %v419
    %v421 = vld [vmem:[#allocation11] sm:$0xff]
    %v422 = vld [vmem:[#allocation11 + $0x8] sm:$0xff]
    %v423 = vld [vmem:[#allocation11 + $0x10] sm:$0xff]
    %v424 = vld [vmem:[#allocation11 + $0x18] sm:$0xff]
    %v425 = vld [vmem:[#allocation11 + $0x20] sm:$0xff]
    %v426 = vld [vmem:[#allocation11 + $0x28] sm:$0xff]
    %v427 = vld [vmem:[#allocation11 + $0x30] sm:$0xff]
    %v428 = vld [vmem:[#allocation11 + $0x38] sm:$0xff]
    %v429 = vld [vmem:[#allocation11 + $0x40] sm:$0xff]
    %v430 = vld [vmem:[#allocation11 + $0x48] sm:$0xff]
    %v431 = vld [vmem:[#allocation11 + $0x50] sm:$0xff]
    %v432 = vld [vmem:[#allocation11 + $0x58] sm:$0xff]
    %v433 = vld [vmem:[#allocation11 + $0x60] sm:$0xff]
    %v434 = vld [vmem:[#allocation11 + $0x68] sm:$0xff]
    %v435 = vld [vmem:[#allocation11 + $0x70] sm:$0xff]
    %v436 = vld [vmem:[#allocation11 + $0x78] sm:$0xff]
    %v437 = vld [vmem:[%s8] sm:$0x3]
    %v439 = vlaneseq
    %v440 = vshrl.u32 %v439, 7
    %v441 = vsub.s32 0, %v440
    %v442 = vrot.slane %v437, %v441
    %v443 = vlaneseq
    %v444 = vshrl.u32 %v443, 7
    %v445 = vsub.s32 1, %v444
    %v446 = vrot.slane %v437, %v445
    %v465 = vunpack.c.l.b16 %v421
    %v466 = vunpack.c.h.b16 %v421
    %v467 = vunpack.c.l.b16 %v422
    %v468 = vunpack.c.h.b16 %v422
    %v469 = vunpack.c.l.b16 %v423
    %v470 = vunpack.c.h.b16 %v423
    %v471 = vunpack.c.l.b16 %v424
    %v472 = vunpack.c.h.b16 %v424
    %v473 = vunpack.c.l.b16 %v425
    %v474 = vunpack.c.h.b16 %v425
    %v475 = vunpack.c.l.b16 %v426
    %v476 = vunpack.c.h.b16 %v426
    %v477 = vunpack.c.l.b16 %v427
    %v478 = vunpack.c.h.b16 %v427
    %v479 = vunpack.c.l.b16 %v428
    %v480 = vunpack.c.h.b16 %v428
    %v481 = vunpack.c.l.b16 %v429
    %v482 = vunpack.c.h.b16 %v429
    %v483 = vunpack.c.l.b16 %v430
    %v484 = vunpack.c.h.b16 %v430
    %v485 = vunpack.c.l.b16 %v431
    %v486 = vunpack.c.h.b16 %v431
    %v487 = vunpack.c.l.b16 %v432
    %v488 = vunpack.c.h.b16 %v432
    %v489 = vunpack.c.l.b16 %v433
    %v490 = vunpack.c.h.b16 %v433
    %v491 = vunpack.c.l.b16 %v434
    %v492 = vunpack.c.h.b16 %v434
    %v493 = vunpack.c.l.b16 %v435
    %v494 = vunpack.c.h.b16 %v435
    %v495 = vunpack.c.l.b16 %v436
    %v496 = vunpack.c.h.b16 %v436
    %v497 = vpack.c.b16 %v467, %v465
    %v498 = vpack.c.b16 %v468, %v466
    %v499 = vpack.c.b16 %v471, %v469
    %v500 = vpack.c.b16 %v472, %v470
    %v501 = vpack.c.b16 %v475, %v473
    %v502 = vpack.c.b16 %v476, %v474
    %v503 = vpack.c.b16 %v479, %v477
    %v504 = vpack.c.b16 %v480, %v478
    %v505 = vpack.c.b16 %v483, %v481
    %v506 = vpack.c.b16 %v484, %v482
    %v507 = vpack.c.b16 %v487, %v485
    %v508 = vpack.c.b16 %v488, %v486
    %v509 = vpack.c.b16 %v491, %v489
    %v510 = vpack.c.b16 %v492, %v490
    %v511 = vpack.c.b16 %v495, %v493
    %v512 = vpack.c.b16 %v496, %v494
    %529 = vmatprep.subr.bf16.mxu0 %v512
    %530 = vmatpush1.bf16.msra.mxu0 %v511
    %531 = vmatprep.subr.bf16.mxu0 %v510
    %532 = vmatpush1.bf16.msra.mxu0 %v509
    %533 = vmatprep.subr.bf16.mxu0 %v508
    %534 = vmatpush1.bf16.msra.mxu0 %v507
    %535 = vmatprep.subr.bf16.mxu0 %v506
    %536 = vmatpush1.bf16.msra.mxu0 %v505
    %537 = vmatprep.subr.bf16.mxu0 %v504
    %538 = vmatpush1.bf16.msra.mxu0 %v503
    %539 = vmatprep.subr.bf16.mxu0 %v502
    %540 = vmatpush1.bf16.msra.mxu0 %v501
    %541 = vmatprep.subr.bf16.mxu0 %v500
    %542 = vmatpush1.bf16.msra.mxu0 %v499
    %543 = vmatprep.subr.bf16.mxu0 %v498
    %544 = vmatpush1.bf16.msra.mxu0 %v497
    %545 = vmatprep.subr.bf16.mxu0 0
    %546 = vmatpush2.bf16.msra.mxu0 0
    %547 = vmatprep.subr.bf16.mxu0 0
    %548 = vmatpush2.bf16.msra.mxu0 0
    %549 = vmatprep.subr.bf16.mxu0 0
    %550 = vmatpush2.bf16.msra.mxu0 0
    %551 = vmatprep.subr.bf16.mxu0 0
    %552 = vmatpush2.bf16.msra.mxu0 0
    %553 = vmatprep.subr.bf16.mxu0 0
    %554 = vmatpush2.bf16.msra.mxu0 0
    %555 = vmatprep.subr.bf16.mxu0 0
    %556 = vmatpush2.bf16.msra.mxu0 0
    %557 = vmatprep.subr.bf16.mxu0 0
    %558 = vmatpush2.bf16.msra.mxu0 0
    %559 = vmatprep.subr.bf16.mxu0 0
    %560 = vmatpush2.bf16.msra.mxu0 0
    %561 = vmatprep.mubr.bf16.mxu0 0
    %562 = vmatmul.mubr.bf16.gmra.mxu0 %v420
    %v563 = vpop.f32.mrf.mxu0
    %v564 = vadd.f32 %v442, %v563
    %v565 = vpop.f32.mrf.mxu0
    %v566 = vadd.f32 %v446, %v565
    %v567 = vpop.f32.mrf.mxu0
    %v568 = vpop.f32.mrf.mxu0
    %569 = vdwg.mxu0
    %v570 = vmul.f32 %v566, 0.5
    %v571 = vmul.f32 %v570, 1.442695
    %v572 = vpow.pop %v571
    %v573 = vmul.f32 %v572, %v190
    %v574 = vadd.f32 %v564, %v573
    %v575 = vpack.c.bf16 %v574, %v574
    %v576 = vld [vmem:[#allocation13] sm:$0xf]
    %v577 = vld [vmem:[#allocation13 + $0x4] sm:$0xf]
    %v578 = vld [vmem:[#allocation13 + $0x8] sm:$0xf]
    %v579 = vld [vmem:[#allocation13 + $0xc] sm:$0xf]
    %v580 = vld [vmem:[#allocation13 + $0x10] sm:$0xf]
    %v581 = vld [vmem:[#allocation13 + $0x14] sm:$0xf]
    %v582 = vld [vmem:[#allocation13 + $0x18] sm:$0xf]
    %v583 = vld [vmem:[#allocation13 + $0x1c] sm:$0xf]
    %v584 = vld [vmem:[#allocation13 + $0x20] sm:$0xf]
    %v585 = vld [vmem:[#allocation13 + $0x24] sm:$0xf]
    %v586 = vld [vmem:[#allocation13 + $0x28] sm:$0xf]
    %v587 = vld [vmem:[#allocation13 + $0x2c] sm:$0xf]
    %v588 = vld [vmem:[#allocation13 + $0x30] sm:$0xf]
    %v589 = vld [vmem:[#allocation13 + $0x34] sm:$0xf]
    %v590 = vld [vmem:[#allocation13 + $0x38] sm:$0xf]
    %v591 = vld [vmem:[#allocation13 + $0x3c] sm:$0xf]
    %v592 = vld [vmem:[#allocation14] sm:$0xf]
    %v593 = vld [vmem:[#allocation14 + $0x4] sm:$0xf]
    %v594 = vld [vmem:[#allocation14 + $0x8] sm:$0xf]
    %v595 = vld [vmem:[#allocation14 + $0xc] sm:$0xf]
    %v596 = vld [vmem:[#allocation14 + $0x10] sm:$0xf]
    %v597 = vld [vmem:[#allocation14 + $0x14] sm:$0xf]
    %v598 = vld [vmem:[#allocation14 + $0x18] sm:$0xf]
    %v599 = vld [vmem:[#allocation14 + $0x1c] sm:$0xf]
    %v600 = vld [vmem:[#allocation14 + $0x20] sm:$0xf]
    %v601 = vld [vmem:[#allocation14 + $0x24] sm:$0xf]
    %v602 = vld [vmem:[#allocation14 + $0x28] sm:$0xf]
    %v603 = vld [vmem:[#allocation14 + $0x2c] sm:$0xf]
    %v604 = vld [vmem:[#allocation14 + $0x30] sm:$0xf]
    %v605 = vld [vmem:[#allocation14 + $0x34] sm:$0xf]
    %v606 = vld [vmem:[#allocation14 + $0x38] sm:$0xf]
    %v607 = vld [vmem:[#allocation14 + $0x3c] sm:$0xf]
    %v624 = vunpack.c.l.b16 %v592
    %v625 = vunpack.c.l.b16 %v593
    %v626 = vunpack.c.l.b16 %v594
    %v627 = vunpack.c.l.b16 %v595
    %v628 = vunpack.c.l.b16 %v596
    %v629 = vunpack.c.l.b16 %v597
    %v630 = vunpack.c.l.b16 %v598
    %v631 = vunpack.c.l.b16 %v599
    %v632 = vunpack.c.l.b16 %v600
    %v633 = vunpack.c.l.b16 %v601
    %v634 = vunpack.c.l.b16 %v602
    %v635 = vunpack.c.l.b16 %v603
    %v636 = vunpack.c.l.b16 %v604
    %v637 = vunpack.c.l.b16 %v605
    %v638 = vunpack.c.l.b16 %v606
    %v639 = vunpack.c.l.b16 %v607
    %v640 = vpack.c.b16 %v625, %v624
    %v641 = vpack.c.b16 %v627, %v626
    %v642 = vpack.c.b16 %v629, %v628
    %v643 = vpack.c.b16 %v631, %v630
    %v644 = vpack.c.b16 %v633, %v632
    %v645 = vpack.c.b16 %v635, %v634
    %v646 = vpack.c.b16 %v637, %v636
    %v647 = vpack.c.b16 %v639, %v638
    %656 = vmatprep.subr.bf16.mxu0 0
    %657 = vmatpush1.bf16.msra.mxu0 %v647
    %658 = vmatprep.subr.bf16.mxu0 0
    %659 = vmatpush1.bf16.msra.mxu0 %v646
    %660 = vmatprep.subr.bf16.mxu0 0
    %661 = vmatpush1.bf16.msra.mxu0 %v645
    %662 = vmatprep.subr.bf16.mxu0 0
    %663 = vmatpush1.bf16.msra.mxu0 %v644
    %664 = vmatprep.subr.bf16.mxu0 0
    %665 = vmatpush1.bf16.msra.mxu0 %v643
    %666 = vmatprep.subr.bf16.mxu0 0
    %667 = vmatpush1.bf16.msra.mxu0 %v642
    %668 = vmatprep.subr.bf16.mxu0 0
    %669 = vmatpush1.bf16.msra.mxu0 %v641
    %670 = vmatprep.subr.bf16.mxu0 0
    %671 = vmatpush1.bf16.msra.mxu0 %v640
    %672 = vmatprep.subr.bf16.mxu0 0
    %673 = vmatpush2.bf16.msra.mxu0 0
    %674 = vmatprep.subr.bf16.mxu0 0
    %675 = vmatpush2.bf16.msra.mxu0 0
    %676 = vmatprep.subr.bf16.mxu0 0
    %677 = vmatpush2.bf16.msra.mxu0 0
    %678 = vmatprep.subr.bf16.mxu0 0
    %679 = vmatpush2.bf16.msra.mxu0 0
    %680 = vmatprep.subr.bf16.mxu0 0
    %681 = vmatpush2.bf16.msra.mxu0 0
    %682 = vmatprep.subr.bf16.mxu0 0
    %683 = vmatpush2.bf16.msra.mxu0 0
    %684 = vmatprep.subr.bf16.mxu0 0
    %685 = vmatpush2.bf16.msra.mxu0 0
    %686 = vmatprep.subr.bf16.mxu0 0
    %687 = vmatpush2.bf16.msra.mxu0 0
    %688 = vmatprep.mubr.bf16.mxu0 0
    %689 = vmatmul.mubr.bf16.gmra.mxu0 %v189
    %v690 = vpop.f32.mrf.mxu0
    %v691 = vadd.f32 0.0, %v690
    %v692 = vpop.f32.mrf.mxu0
    %v693 = vpop.f32.mrf.mxu0
    %v694 = vpop.f32.mrf.mxu0
    %695 = vdwg.mxu0
    %v712 = vunpack.c.l.b16 %v576
    %v713 = vunpack.c.l.b16 %v577
    %v714 = vunpack.c.l.b16 %v578
    %v715 = vunpack.c.l.b16 %v579
    %v716 = vunpack.c.l.b16 %v580
    %v717 = vunpack.c.l.b16 %v581
    %v718 = vunpack.c.l.b16 %v582
    %v719 = vunpack.c.l.b16 %v583
    %v720 = vunpack.c.l.b16 %v584
    %v721 = vunpack.c.l.b16 %v585
    %v722 = vunpack.c.l.b16 %v586
    %v723 = vunpack.c.l.b16 %v587
    %v724 = vunpack.c.l.b16 %v588
    %v725 = vunpack.c.l.b16 %v589
    %v726 = vunpack.c.l.b16 %v590
    %v727 = vunpack.c.l.b16 %v591
    %v728 = vpack.c.b16 %v713, %v712
    %v729 = vpack.c.b16 %v715, %v714
    %v730 = vpack.c.b16 %v717, %v716
    %v731 = vpack.c.b16 %v719, %v718
    %v732 = vpack.c.b16 %v721, %v720
    %v733 = vpack.c.b16 %v723, %v722
    %v734 = vpack.c.b16 %v725, %v724
    %v735 = vpack.c.b16 %v727, %v726
    %744 = vmatprep.subr.bf16.mxu0 0
    %745 = vmatpush1.bf16.msra.mxu0 %v735
    %746 = vmatprep.subr.bf16.mxu0 0
    %747 = vmatpush1.bf16.msra.mxu0 %v734
    %748 = vmatprep.subr.bf16.mxu0 0
    %749 = vmatpush1.bf16.msra.mxu0 %v733
    %750 = vmatprep.subr.bf16.mxu0 0
    %751 = vmatpush1.bf16.msra.mxu0 %v732
    %752 = vmatprep.subr.bf16.mxu0 0
    %753 = vmatpush1.bf16.msra.mxu0 %v731
    %754 = vmatprep.subr.bf16.mxu0 0
    %755 = vmatpush1.bf16.msra.mxu0 %v730
    %756 = vmatprep.subr.bf16.mxu0 0
    %757 = vmatpush1.bf16.msra.mxu0 %v729
    %758 = vmatprep.subr.bf16.mxu0 0
    %759 = vmatpush1.bf16.msra.mxu0 %v728
    %760 = vmatprep.subr.bf16.mxu0 0
    %761 = vmatpush2.bf16.msra.mxu0 0
    %762 = vmatprep.subr.bf16.mxu0 0
    %763 = vmatpush2.bf16.msra.mxu0 0
    %764 = vmatprep.subr.bf16.mxu0 0
    %765 = vmatpush2.bf16.msra.mxu0 0
    %766 = vmatprep.subr.bf16.mxu0 0
    %767 = vmatpush2.bf16.msra.mxu0 0
    %768 = vmatprep.subr.bf16.mxu0 0
    %769 = vmatpush2.bf16.msra.mxu0 0
    %770 = vmatprep.subr.bf16.mxu0 0
    %771 = vmatpush2.bf16.msra.mxu0 0
    %772 = vmatprep.subr.bf16.mxu0 0
    %773 = vmatpush2.bf16.msra.mxu0 0
    %774 = vmatprep.subr.bf16.mxu0 0
    %775 = vmatpush2.bf16.msra.mxu0 0
    %776 = vmatprep.mubr.bf16.mxu0 0
    %777 = vmatmul.mubr.bf16.gmra.mxu0 %v575
    %v778 = vpop.f32.mrf.mxu0
    %v779 = vadd.f32 %v691, %v778
    %v780 = vpop.f32.mrf.mxu0
    %v781 = vpop.f32.mrf.mxu0
    %v782 = vpop.f32.mrf.mxu0
    %783 = vdwg.mxu0
    %v784 = vld [vmem:[%s11] sm:$0x1]
    %v786 = vlaneseq
    %v787 = vshrl.u32 %v786, 7
    %v788 = vsub.s32 0, %v787
    %v789 = vrot.slane %v784, %v788
    %v791 = vadd.f32 %v779, %v789
    %vm792 = vcmp.gt.f32.partialorder %v791, 0.0
    %v793 = vmul.f32 %v791, 0.2
    %v794 = vsel %vm792, %v791, %v793
    %v795 = vpack.c.bf16 %v794, %v794
    %v796 = vld [vmem:[#allocation16] sm:$0xf]
    %v797 = vld [vmem:[#allocation16 + $0x4] sm:$0xf]
    %v798 = vld [vmem:[#allocation16 + $0x8] sm:$0xf]
    %v799 = vld [vmem:[#allocation16 + $0xc] sm:$0xf]
    %v800 = vld [vmem:[#allocation16 + $0x10] sm:$0xf]
    %v801 = vld [vmem:[#allocation16 + $0x14] sm:$0xf]
    %v802 = vld [vmem:[#allocation16 + $0x18] sm:$0xf]
    %v803 = vld [vmem:[#allocation16 + $0x1c] sm:$0xf]
    %v804 = vld [vmem:[#allocation16 + $0x20] sm:$0xf]
    %v805 = vld [vmem:[#allocation16 + $0x24] sm:$0xf]
    %v806 = vld [vmem:[#allocation16 + $0x28] sm:$0xf]
    %v807 = vld [vmem:[#allocation16 + $0x2c] sm:$0xf]
    %v808 = vld [vmem:[#allocation16 + $0x30] sm:$0xf]
    %v809 = vld [vmem:[#allocation16 + $0x34] sm:$0xf]
    %v810 = vld [vmem:[#allocation16 + $0x38] sm:$0xf]
    %v811 = vld [vmem:[#allocation16 + $0x3c] sm:$0xf]
    %v812 = vld [vmem:[%s13] sm:$0x1]
    %v814 = vlaneseq
    %v815 = vshrl.u32 %v814, 7
    %v816 = vsub.s32 0, %v815
    %v817 = vrot.slane %v812, %v816
    %v835 = vunpack.c.l.b16 %v796
    %v836 = vunpack.c.l.b16 %v797
    %v837 = vunpack.c.l.b16 %v798
    %v838 = vunpack.c.l.b16 %v799
    %v839 = vunpack.c.l.b16 %v800
    %v840 = vunpack.c.l.b16 %v801
    %v841 = vunpack.c.l.b16 %v802
    %v842 = vunpack.c.l.b16 %v803
    %v843 = vunpack.c.l.b16 %v804
    %v844 = vunpack.c.l.b16 %v805
    %v845 = vunpack.c.l.b16 %v806
    %v846 = vunpack.c.l.b16 %v807
    %v847 = vunpack.c.l.b16 %v808
    %v848 = vunpack.c.l.b16 %v809
    %v849 = vunpack.c.l.b16 %v810
    %v850 = vunpack.c.l.b16 %v811
    %v851 = vpack.c.b16 %v836, %v835
    %v852 = vpack.c.b16 %v838, %v837
    %v853 = vpack.c.b16 %v840, %v839
    %v854 = vpack.c.b16 %v842, %v841
    %v855 = vpack.c.b16 %v844, %v843
    %v856 = vpack.c.b16 %v846, %v845
    %v857 = vpack.c.b16 %v848, %v847
    %v858 = vpack.c.b16 %v850, %v849
    %867 = vmatprep.subr.bf16.mxu0 0
    %868 = vmatpush1.bf16.msra.mxu0 %v858
    %869 = vmatprep.subr.bf16.mxu0 0
    %870 = vmatpush1.bf16.msra.mxu0 %v857
    %871 = vmatprep.subr.bf16.mxu0 0
    %872 = vmatpush1.bf16.msra.mxu0 %v856
    %873 = vmatprep.subr.bf16.mxu0 0
    %874 = vmatpush1.bf16.msra.mxu0 %v855
    %875 = vmatprep.subr.bf16.mxu0 0
    %876 = vmatpush1.bf16.msra.mxu0 %v854
    %877 = vmatprep.subr.bf16.mxu0 0
    %878 = vmatpush1.bf16.msra.mxu0 %v853
    %879 = vmatprep.subr.bf16.mxu0 0
    %880 = vmatpush1.bf16.msra.mxu0 %v852
    %881 = vmatprep.subr.bf16.mxu0 0
    %882 = vmatpush1.bf16.msra.mxu0 %v851
    %883 = vmatprep.subr.bf16.mxu0 0
    %884 = vmatpush2.bf16.msra.mxu0 0
    %885 = vmatprep.subr.bf16.mxu0 0
    %886 = vmatpush2.bf16.msra.mxu0 0
    %887 = vmatprep.subr.bf16.mxu0 0
    %888 = vmatpush2.bf16.msra.mxu0 0
    %889 = vmatprep.subr.bf16.mxu0 0
    %890 = vmatpush2.bf16.msra.mxu0 0
    %891 = vmatprep.subr.bf16.mxu0 0
    %892 = vmatpush2.bf16.msra.mxu0 0
    %893 = vmatprep.subr.bf16.mxu0 0
    %894 = vmatpush2.bf16.msra.mxu0 0
    %895 = vmatprep.subr.bf16.mxu0 0
    %896 = vmatpush2.bf16.msra.mxu0 0
    %897 = vmatprep.subr.bf16.mxu0 0
    %898 = vmatpush2.bf16.msra.mxu0 0
    %899 = vmatprep.mubr.bf16.mxu0 0
    %900 = vmatmul.mubr.bf16.gmra.mxu0 %v795
    %v901 = vpop.f32.mrf.mxu0
    %v902 = vadd.f32 %v817, %v901
    %v903 = vpop.f32.mrf.mxu0
    %v904 = vpop.f32.mrf.mxu0
    %v905 = vpop.f32.mrf.mxu0
    %906 = vdwg.mxu0
    %vm907 = vcmp.gt.f32.partialorder %v902, 0.0
    %v908 = vmul.f32 %v902, 0.2
    %v909 = vsel %vm907, %v902, %v908
    %v910 = vpack.c.bf16 %v909, %v909
    %v911 = vld [vmem:[#allocation17] sm:$0xf]
    %v912 = vld [vmem:[#allocation17 + $0x4] sm:$0xf]
    %v913 = vld [vmem:[#allocation17 + $0x8] sm:$0xf]
    %v914 = vld [vmem:[#allocation17 + $0xc] sm:$0xf]
    %v915 = vld [vmem:[#allocation17 + $0x10] sm:$0xf]
    %v916 = vld [vmem:[#allocation17 + $0x14] sm:$0xf]
    %v917 = vld [vmem:[#allocation17 + $0x18] sm:$0xf]
    %v918 = vld [vmem:[#allocation17 + $0x1c] sm:$0xf]
    %v919 = vld [vmem:[#allocation17 + $0x20] sm:$0xf]
    %v920 = vld [vmem:[#allocation17 + $0x24] sm:$0xf]
    %v921 = vld [vmem:[#allocation17 + $0x28] sm:$0xf]
    %v922 = vld [vmem:[#allocation17 + $0x2c] sm:$0xf]
    %v923 = vld [vmem:[#allocation17 + $0x30] sm:$0xf]
    %v924 = vld [vmem:[#allocation17 + $0x34] sm:$0xf]
    %v925 = vld [vmem:[#allocation17 + $0x38] sm:$0xf]
    %v926 = vld [vmem:[#allocation17 + $0x3c] sm:$0xf]
    %v927 = vld [vmem:[%s15] sm:$0x1]
    %v929 = vlaneseq
    %v930 = vshrl.u32 %v929, 7
    %v931 = vsub.s32 0, %v930
    %v932 = vrot.slane %v927, %v931
    %v950 = vunpack.c.l.b16 %v911
    %v951 = vunpack.c.l.b16 %v912
    %v952 = vunpack.c.l.b16 %v913
    %v953 = vunpack.c.l.b16 %v914
    %v954 = vunpack.c.l.b16 %v915
    %v955 = vunpack.c.l.b16 %v916
    %v956 = vunpack.c.l.b16 %v917
    %v957 = vunpack.c.l.b16 %v918
    %v958 = vunpack.c.l.b16 %v919
    %v959 = vunpack.c.l.b16 %v920
    %v960 = vunpack.c.l.b16 %v921
    %v961 = vunpack.c.l.b16 %v922
    %v962 = vunpack.c.l.b16 %v923
    %v963 = vunpack.c.l.b16 %v924
    %v964 = vunpack.c.l.b16 %v925
    %v965 = vunpack.c.l.b16 %v926
    %v966 = vpack.c.b16 %v951, %v950
    %v967 = vpack.c.b16 %v953, %v952
    %v968 = vpack.c.b16 %v955, %v954
    %v969 = vpack.c.b16 %v957, %v956
    %v970 = vpack.c.b16 %v959, %v958
    %v971 = vpack.c.b16 %v961, %v960
    %v972 = vpack.c.b16 %v963, %v962
    %v973 = vpack.c.b16 %v965, %v964
    %982 = vmatprep.subr.bf16.mxu0 0
    %983 = vmatpush1.bf16.msra.mxu0 %v973
    %984 = vmatprep.subr.bf16.mxu0 0
    %985 = vmatpush1.bf16.msra.mxu0 %v972
    %986 = vmatprep.subr.bf16.mxu0 0
    %987 = vmatpush1.bf16.msra.mxu0 %v971
    %988 = vmatprep.subr.bf16.mxu0 0
    %989 = vmatpush1.bf16.msra.mxu0 %v970
    %990 = vmatprep.subr.bf16.mxu0 0
    %991 = vmatpush1.bf16.msra.mxu0 %v969
    %992 = vmatprep.subr.bf16.mxu0 0
    %993 = vmatpush1.bf16.msra.mxu0 %v968
    %994 = vmatprep.subr.bf16.mxu0 0
    %995 = vmatpush1.bf16.msra.mxu0 %v967
    %996 = vmatprep.subr.bf16.mxu0 0
    %997 = vmatpush1.bf16.msra.mxu0 %v966
    %998 = vmatprep.subr.bf16.mxu0 0
    %999 = vmatpush2.bf16.msra.mxu0 0
    %1000 = vmatprep.subr.bf16.mxu0 0
    %1001 = vmatpush2.bf16.msra.mxu0 0
    %1002 = vmatprep.subr.bf16.mxu0 0
    %1003 = vmatpush2.bf16.msra.mxu0 0
    %1004 = vmatprep.subr.bf16.mxu0 0
    %1005 = vmatpush2.bf16.msra.mxu0 0
    %1006 = vmatprep.subr.bf16.mxu0 0
    %1007 = vmatpush2.bf16.msra.mxu0 0
    %1008 = vmatprep.subr.bf16.mxu0 0
    %1009 = vmatpush2.bf16.msra.mxu0 0
    %1010 = vmatprep.subr.bf16.mxu0 0
    %1011 = vmatpush2.bf16.msra.mxu0 0
    %1012 = vmatprep.subr.bf16.mxu0 0
    %1013 = vmatpush2.bf16.msra.mxu0 0
    %1014 = vmatprep.mubr.bf16.mxu0 0
    %1015 = vmatmul.mubr.bf16.gmra.mxu0 %v910
    %v1016 = vpop.f32.mrf.mxu0
    %v1017 = vadd.f32 %v932, %v1016
    %v1018 = vpop.f32.mrf.mxu0
    %v1019 = vpop.f32.mrf.mxu0
    %v1020 = vpop.f32.mrf.mxu0
    %1021 = vdwg.mxu0
    %1022 = vst [vmem:[#allocation19] sm:$0xff] %v1017
    %1023 = vst [vmem:[#allocation20] sm:$0xff] %v564
    %1024 = vst [vmem:[#allocation20 + $0x8] sm:$0xff] %v566
    // Predicated region
    $region106: #{tpu_custom_call.1} parent=1 // pred_check
      _
    $region107: #{tpu_custom_call.1} parent=1 // pred_check_branch
      %1026 = sbr.rel (0) target = $region109
    $region108: #{tpu_custom_call.1} parent=1 // pred_region
      %s1028 = ssub.s32 128, 128
      %1029 = vsyncadd [#allocation4], %s1028
      %s1031 = sshll.u32 [#allocation19], 4
      %s1032 = int_to_ptr.vmem [resolvable:$true] %s1031
      %1034 = dma.vmem_to_hbm [thread:$0]  %s1032, 128, %s16, [#allocation4]
    $region109: #{tpu_custom_call.1} parent=1 // pred_fallthru
      _
    // Predicated region
    $region110: #{tpu_custom_call.1} parent=1 // pred_check
      _
    $region111: #{tpu_custom_call.1} parent=1 // pred_check_branch
      %1036 = sbr.rel (0) target = $region113
    $region112: #{tpu_custom_call.1} parent=1 // pred_region
      %s1038 = ssub.s32 256, 256
      %1039 = vsyncadd [#allocation21], %s1038
      %s1041 = sshll.u32 [#allocation20], 4
      %s1042 = int_to_ptr.vmem [resolvable:$true] %s1041
      %1044 = dma.vmem_to_hbm [thread:$0]  %s1042, 256, %s17, [#allocation21]
    $region113: #{tpu_custom_call.1} parent=1 // pred_fallthru
      _
    // Predicated region
    $region114: #{tpu_custom_call.1} parent=1 // pred_check
      _
    $region115: #{tpu_custom_call.1} parent=1 // pred_check_branch
      %1046 = sbr.rel (0) target = $region117
    $region116: #{tpu_custom_call.1} parent=1 // pred_region
      %1047 = dma.done [#allocation4], 128
    $region117: #{tpu_custom_call.1} parent=1 // pred_fallthru
      _
    // Predicated region
    $region118: #{tpu_custom_call.1} parent=1 // pred_check
      _
    $region119: #{tpu_custom_call.1} parent=1 // pred_check_branch
      %1049 = sbr.rel (0) target = $region121
    $region120: #{tpu_custom_call.1} parent=1 // pred_region
      %1050 = dma.done [#allocation21], 256
    $region121: #{tpu_custom_call.1} parent=1 // pred_fallthru
      _
    %1051 = vsyncpa [#allocation3], 1
    %1052 = vsyncpa [#allocation6], 1
    %1053 = vsyncpa [#allocation9], 1
    %1054 = vsyncpa [#allocation12], 1
    %1055 = vsyncpa [#allocation15], 1
    %1056 = vsyncpa [#allocation18], 1
    %1057 = vsyncpa [#allocation4], 1
    %1058 = vsyncpa [#allocation21], 1

// kernel: tpu_custom_call.1
$region0: #{tpu_custom_call.1}
  #allocation0 [shape = 'u32[]', space=smem, size = 0x4, offset = 0x4, fixed_abs, tag = 'smem constant byte address 0x4 - core index']
  #allocation1 [shape = 'u32[144,128]{1,0:T(1,128)}', space=vmem, size = 0x12000, scoped, tag = 'internal scratch']
  %s0 = inlined_call_operand.hbm [shape: bf16[8,128], index: 0, kind: input, shape index: {}]
  %s1 = inlined_call_operand.hbm [shape: bf16[8,128], index: 1, kind: input, shape index: {}]
  %s2 = inlined_call_operand.hbm [shape: f32[8,128], index: 2, kind: input, shape index: {}]
  %s3 = inlined_call_operand.hbm [shape: bf16[128,128], index: 3, kind: input, shape index: {}]
  %s4 = inlined_call_operand.vmem [shape: f32[1,128], index: 4, kind: input, shape index: {}]
  %s5 = inlined_call_operand.hbm [shape: bf16[128,128], index: 5, kind: input, shape index: {}]
  %s6 = inlined_call_operand.vmem [shape: f32[1,128], index: 6, kind: input, shape index: {}]
  %s7 = inlined_call_operand.hbm [shape: bf16[128,256], index: 7, kind: input, shape index: {}]
  %s8 = inlined_call_operand.vmem [shape: f32[1,256], index: 8, kind: input, shape index: {}]
  %s9 = inlined_call_operand.hbm [shape: bf16[128,128], index: 9, kind: input, shape index: {}]
  %s10 = inlined_call_operand.hbm [shape: bf16[128,128], index: 10, kind: input, shape index: {}]
  %s11 = inlined_call_operand.vmem [shape: f32[1,128], index: 11, kind: input, shape index: {}]
  %s12 = inlined_call_operand.hbm [shape: bf16[128,128], index: 12, kind: input, shape index: {}]
  %s13 = inlined_call_operand.vmem [shape: f32[1,128], index: 13, kind: input, shape index: {}]
  %s14 = inlined_call_operand.hbm [shape: bf16[128,128], index: 14, kind: input, shape index: {}]
  %s15 = inlined_call_operand.vmem [shape: f32[1,128], index: 15, kind: input, shape index: {}]
  %s16 = inlined_call_operand.hbm [shape: f32[8,128], index: 16, kind: output, shape index: {0}]
  %s17 = inlined_call_operand.hbm [shape: f32[8,256], index: 17, kind: output, shape index: {1}]
  %18 = xla_tuple %s16, %s17
  %s19 = sld [smem:[#allocation0]]
  $region122: #{tpu_custom_call.1} parent=0
    _
  %s21 = ssub.s32 1, %s19
  %s22 = scalar_select 0, %s21, %s19
  $region1: #{tpu_custom_call.1} parent=0
    #allocation2 [shape = 'u8[2048]{0}', space=vmem, size = 0x800, scoped, tag = 'input window, operand 0, single buffered']
    #allocation3 [shape = 's32[1]{0}', space=sflag, size = 0x4, scoped, tag = 'scoped memory for tpu_custom_call.1']
    #allocation4 [shape = 's32[1]{0}', space=sflag, size = 0x4, scoped, tag = 'scoped memory for tpu_custom_call.1']
    #allocation5 [shape = 'u8[2048]{0}', space=vmem, size = 0x800, scoped, tag = 'input window, operand 1, single buffered']
    #allocation6 [shape = 's32[1]{0}', space=sflag, size = 0x4, scoped, tag = 'scoped memory for tpu_custom_call.1']
    #allocation7 [shape = 'u8[4096]{0}', space=vmem, size = 0x1000, scoped, tag = 'input window, operand 2, single buffered']
    #allocation8 [shape = 'u8[32768]{0}', space=vmem, size = 0x8000, scoped, tag = 'input window, operand 3, single buffered']
    #allocation9 [shape = 's32[1]{0}', space=sflag, size = 0x4, scoped, tag = 'scoped memory for tpu_custom_call.1']
    #allocation10 [shape = 'u8[32768]{0}', space=vmem, size = 0x8000, scoped, tag = 'input window, operand 5, single buffered']
    #allocation11 [shape = 'u8[65536]{0}', space=vmem, size = 0x10000, scoped, tag = 'input window, operand 7, single buffered']
    #allocation12 [shape = 's32[1]{0}', space=sflag, size = 0x4, scoped, tag = 'scoped memory for tpu_custom_call.1']
    #allocation13 [shape = 'u8[32768]{0}', space=vmem, size = 0x8000, scoped, tag = 'input window, operand 9, single buffered']
    #allocation14 [shape = 'u8[32768]{0}', space=vmem, size = 0x8000, scoped, tag = 'input window, operand 10, single buffered']
    #allocation15 [shape = 's32[1]{0}', space=sflag, size = 0x4, scoped, tag = 'scoped memory for tpu_custom_call.1']
    #allocation16 [shape = 'u8[32768]{0}', space=vmem, size = 0x8000, scoped, tag = 'input window, operand 12, single buffered']
    #allocation17 [shape = 'u8[32768]{0}', space=vmem, size = 0x8000, scoped, tag = 'input window, operand 14, single buffered']
    #allocation18 [shape = 's32[1]{0}', space=sflag, size = 0x4, scoped, tag = 'scoped memory for tpu_custom_call.1']
    #allocation19 [shape = 'u8[4096]{0}', space=vmem, size = 0x1000, scoped, tag = 'output window, operand 0, single buffered']
    #allocation20 [shape = 'u8[8192]{0}', space=vmem, size = 0x2000, scoped, tag = 'output window, operand 1, single buffered']
    #allocation21 [shape = 's32[1]{0}', space=sflag, size = 0x4, scoped, tag = 'scoped memory for tpu_custom_call.1']
    %23 = vsyncpa [#allocation3], 0
    %24 = vsyncpa [#allocation6], 0
    %25 = vsyncpa [#allocation9], 0
    %26 = vsyncpa [#allocation12], 0
    %27 = vsyncpa [#allocation15], 0
    %28 = vsyncpa [#allocation18], 0
    %29 = vsyncpa [#allocation4], 0
    %30 = vsyncpa [#allocation21], 0
    // Predicated region
    $region2: #{tpu_custom_call.1} parent=1 // pred_check
      _
    $region3: #{tpu_custom_call.1} parent=1 // pred_check_branch
      %32 = sbr.rel (0) target = $region5
    $region4: #{tpu_custom_call.1} parent=1 // pred_region
      %s34 = ssub.s32 64, 64
      %35 = vsyncadd [#allocation3], %s34
      %s37 = sshll.u32 [#allocation2], 4
      %s38 = int_to_ptr.vmem [resolvable:$true] %s37
      %40 = dma.hbm_to_vmem [thread:$0]  %s0, 64, %s38, [#allocation3]
    $region5: #{tpu_custom_call.1} parent=1 // pred_fallthru
      _
    // Predicated region
    $region6: #{tpu_custom_call.1} parent=1 // pred_check
      _
    $region7: #{tpu_custom_call.1} parent=1 // pred_check_branch
      %42 = sbr.rel (0) target = $region9
    $region8: #{tpu_custom_call.1} parent=1 // pred_region
      %s44 = ssub.s32 64, 64
      %45 = vsyncadd [#allocation6], %s44
      %s47 = sshll.u32 [#allocation5], 4
      %s48 = int_to_ptr.vmem [resolvable:$true] %s47
      %50 = dma.hbm_to_vmem [thread:$0]  %s1, 64, %s48, [#allocation6]
    $region9: #{tpu_custom_call.1} parent=1 // pred_fallthru
      _
    // Predicated region
    $region10: #{tpu_custom_call.1} parent=1 // pred_check
      _
    $region11: #{tpu_custom_call.1} parent=1 // pred_check_branch
      %52 = sbr.rel (0) target = $region13
    $region12: #{tpu_custom_call.1} parent=1 // pred_region
      %s54 = ssub.s32 128, 128
      %55 = vsyncadd [#allocation6], %s54
      %s57 = sshll.u32 [#allocation7], 4
      %s58 = int_to_ptr.vmem [resolvable:$true] %s57
      %60 = dma.hbm_to_vmem [thread:$0]  %s2, 128, %s58, [#allocation6]
    $region13: #{tpu_custom_call.1} parent=1 // pred_fallthru
      _
    // Predicated region
    $region14: #{tpu_custom_call.1} parent=1 // pred_check
      _
    $region15: #{tpu_custom_call.1} parent=1 // pred_check_branch
      %62 = sbr.rel (0) target = $region17
    $region16: #{tpu_custom_call.1} parent=1 // pred_region
      %s64 = ssub.s32 1024, 1024
      %65 = vsyncadd [#allocation9], %s64
      %s66 = sshll.u32 [#allocation8], 4
      %s67 = int_to_ptr.vmem [resolvable:$true] %s66
      %72 = dma.hbm_to_vmem [thread:$0]  %s3, 1024, %s67, [#allocation9], 64, 64, 4
    $region17: #{tpu_custom_call.1} parent=1 // pred_fallthru
      _
    // Predicated region
    $region18: #{tpu_custom_call.1} parent=1 // pred_check
      _
    $region19: #{tpu_custom_call.1} parent=1 // pred_check_branch
      %74 = sbr.rel (0) target = $region21
    $region20: #{tpu_custom_call.1} parent=1 // pred_region
      _
    $region21: #{tpu_custom_call.1} parent=1 // pred_fallthru
      _
    // Predicated region
    $region22: #{tpu_custom_call.1} parent=1 // pred_check
      _
    $region23: #{tpu_custom_call.1} parent=1 // pred_check_branch
      %76 = sbr.rel (0) target = $region25
    $region24: #{tpu_custom_call.1} parent=1 // pred_region
      %s78 = ssub.s32 1024, 1024
      %79 = vsyncadd [#allocation9], %s78
      %s80 = sshll.u32 [#allocation10], 4
      %s81 = int_to_ptr.vmem [resolvable:$true] %s80
      %86 = dma.hbm_to_vmem [thread:$0]  %s5, 1024, %s81, [#allocation9], 64, 64, 4
    $region25: #{tpu_custom_call.1} parent=1 // pred_fallthru
      _
    // Predicated region
    $region26: #{tpu_custom_call.1} parent=1 // pred_check
      _
    $region27: #{tpu_custom_call.1} parent=1 // pred_check_branch
      %88 = sbr.rel (0) target = $region29
    $region28: #{tpu_custom_call.1} parent=1 // pred_region
      _
    $region29: #{tpu_custom_call.1} parent=1 // pred_fallthru
      _
    // Predicated region
    $region30: #{tpu_custom_call.1} parent=1 // pred_check
      _
    $region31: #{tpu_custom_call.1} parent=1 // pred_check_branch
      %90 = sbr.rel (0) target = $region33
    $region32: #{tpu_custom_call.1} parent=1 // pred_region
      %s92 = ssub.s32 2048, 2048
      %93 = vsyncadd [#allocation12], %s92
      %s94 = sshll.u32 [#allocation11], 4
      %s95 = int_to_ptr.vmem [resolvable:$true] %s94
      %100 = dma.hbm_to_vmem [thread:$0]  %s7, 2048, %s95, [#allocation12], 128, 128, 8
    $region33: #{tpu_custom_call.1} parent=1 // pred_fallthru
      _
    // Predicated region
    $region34: #{tpu_custom_call.1} parent=1 // pred_check
      _
    $region35: #{tpu_custom_call.1} parent=1 // pred_check_branch
      %102 = sbr.rel (0) target = $region37
    $region36: #{tpu_custom_call.1} parent=1 // pred_region
      _
    $region37: #{tpu_custom_call.1} parent=1 // pred_fallthru
      _
    // Predicated region
    $region38: #{tpu_custom_call.1} parent=1 // pred_check
      _
    $region39: #{tpu_custom_call.1} parent=1 // pred_check_branch
      %104 = sbr.rel (0) target = $region41
    $region40: #{tpu_custom_call.1} parent=1 // pred_region
      %s106 = ssub.s32 1024, 1024
      %107 = vsyncadd [#allocation12], %s106
      %s108 = sshll.u32 [#allocation13], 4
      %s109 = int_to_ptr.vmem [resolvable:$true] %s108
      %114 = dma.hbm_to_vmem [thread:$0]  %s9, 1024, %s109, [#allocation12], 64, 64, 4
    $region41: #{tpu_custom_call.1} parent=1 // pred_fallthru
      _
    // Predicated region
    $region42: #{tpu_custom_call.1} parent=1 // pred_check
      _
    $region43: #{tpu_custom_call.1} parent=1 // pred_check_branch
      %116 = sbr.rel (0) target = $region45
    $region44: #{tpu_custom_call.1} parent=1 // pred_region
      %s118 = ssub.s32 1024, 1024
      %119 = vsyncadd [#allocation15], %s118
      %s120 = sshll.u32 [#allocation14], 4
      %s121 = int_to_ptr.vmem [resolvable:$true] %s120
      %126 = dma.hbm_to_vmem [thread:$0]  %s10, 1024, %s121, [#allocation15], 64, 64, 4
    $region45: #{tpu_custom_call.1} parent=1 // pred_fallthru
      _
    // Predicated region
    $region46: #{tpu_custom_call.1} parent=1 // pred_check
      _
    $region47: #{tpu_custom_call.1} parent=1 // pred_check_branch
      %128 = sbr.rel (0) target = $region49
    $region48: #{tpu_custom_call.1} parent=1 // pred_region
      _
    $region49: #{tpu_custom_call.1} parent=1 // pred_fallthru
      _
    // Predicated region
    $region50: #{tpu_custom_call.1} parent=1 // pred_check
      _
    $region51: #{tpu_custom_call.1} parent=1 // pred_check_branch
      %130 = sbr.rel (0) target = $region53
    $region52: #{tpu_custom_call.1} parent=1 // pred_region
      %s132 = ssub.s32 1024, 1024
      %133 = vsyncadd [#allocation15], %s132
      %s134 = sshll.u32 [#allocation16], 4
      %s135 = int_to_ptr.vmem [resolvable:$true] %s134
      %140 = dma.hbm_to_vmem [thread:$0]  %s12, 1024, %s135, [#allocation15], 64, 64, 4
    $region53: #{tpu_custom_call.1} parent=1 // pred_fallthru
      _
    // Predicated region
    $region54: #{tpu_custom_call.1} parent=1 // pred_check
      _
    $region55: #{tpu_custom_call.1} parent=1 // pred_check_branch
      %142 = sbr.rel (0) target = $region57
    $region56: #{tpu_custom_call.1} parent=1 // pred_region
      _
    $region57: #{tpu_custom_call.1} parent=1 // pred_fallthru
      _
    // Predicated region
    $region58: #{tpu_custom_call.1} parent=1 // pred_check
      _
    $region59: #{tpu_custom_call.1} parent=1 // pred_check_branch
      %144 = sbr.rel (0) target = $region61
    $region60: #{tpu_custom_call.1} parent=1 // pred_region
      %s146 = ssub.s32 1024, 1024
      %147 = vsyncadd [#allocation18], %s146
      %s148 = sshll.u32 [#allocation17], 4
      %s149 = int_to_ptr.vmem [resolvable:$true] %s148
      %154 = dma.hbm_to_vmem [thread:$0]  %s14, 1024, %s149, [#allocation18], 64, 64, 4
    $region61: #{tpu_custom_call.1} parent=1 // pred_fallthru
      _
    // Predicated region
    $region62: #{tpu_custom_call.1} parent=1 // pred_check
      _
    $region63: #{tpu_custom_call.1} parent=1 // pred_check_branch
      %156 = sbr.rel (0) target = $region65
    $region64: #{tpu_custom_call.1} parent=1 // pred_region
      _
    $region65: #{tpu_custom_call.1} parent=1 // pred_fallthru
      _
    // Predicated region
    $region66: #{tpu_custom_call.1} parent=1 // pred_check
      _
    $region67: #{tpu_custom_call.1} parent=1 // pred_check_branch
      %158 = sbr.rel (0) target = $region69
    $region68: #{tpu_custom_call.1} parent=1 // pred_region
      %159 = dma.done [#allocation3], 64
    $region69: #{tpu_custom_call.1} parent=1 // pred_fallthru
      _
    // Predicated region
    $region70: #{tpu_custom_call.1} parent=1 // pred_check
      _
    $region71: #{tpu_custom_call.1} parent=1 // pred_check_branch
      %161 = sbr.rel (0) target = $region73
    $region72: #{tpu_custom_call.1} parent=1 // pred_region
      %162 = dma.done [#allocation6], 64
    $region73: #{tpu_custom_call.1} parent=1 // pred_fallthru
      _
    // Predicated region
    $region74: #{tpu_custom_call.1} parent=1 // pred_check
      _
    $region75: #{tpu_custom_call.1} parent=1 // pred_check_branch
      %164 = sbr.rel (0) target = $region77
    $region76: #{tpu_custom_call.1} parent=1 // pred_region
      %165 = dma.done [#allocation6], 128
    $region77: #{tpu_custom_call.1} parent=1 // pred_fallthru
      _
    // Predicated region
    $region78: #{tpu_custom_call.1} parent=1 // pred_check
      _
    $region79: #{tpu_custom_call.1} parent=1 // pred_check_branch
      %167 = sbr.rel (0) target = $region81
    $region80: #{tpu_custom_call.1} parent=1 // pred_region
      %168 = dma.done [#allocation9], 1024
    $region81: #{tpu_custom_call.1} parent=1 // pred_fallthru
      _
    // Predicated region
    $region82: #{tpu_custom_call.1} parent=1 // pred_check
      _
    $region83: #{tpu_custom_call.1} parent=1 // pred_check_branch
      %170 = sbr.rel (0) target = $region85
    $region84: #{tpu_custom_call.1} parent=1 // pred_region
      %171 = dma.done [#allocation9], 1024
    $region85: #{tpu_custom_call.1} parent=1 // pred_fallthru
      _
    // Predicated region
    $region86: #{tpu_custom_call.1} parent=1 // pred_check
      _
    $region87: #{tpu_custom_call.1} parent=1 // pred_check_branch
      %173 = sbr.rel (0) target = $region89
    $region88: #{tpu_custom_call.1} parent=1 // pred_region
      %174 = dma.done [#allocation12], 2048
    $region89: #{tpu_custom_call.1} parent=1 // pred_fallthru
      _
    // Predicated region
    $region90: #{tpu_custom_call.1} parent=1 // pred_check
      _
    $region91: #{tpu_custom_call.1} parent=1 // pred_check_branch
      %176 = sbr.rel (0) target = $region93
    $region92: #{tpu_custom_call.1} parent=1 // pred_region
      %177 = dma.done [#allocation12], 1024
    $region93: #{tpu_custom_call.1} parent=1 // pred_fallthru
      _
    // Predicated region
    $region94: #{tpu_custom_call.1} parent=1 // pred_check
      _
    $region95: #{tpu_custom_call.1} parent=1 // pred_check_branch
      %179 = sbr.rel (0) target = $region97
    $region96: #{tpu_custom_call.1} parent=1 // pred_region
      %180 = dma.done [#allocation15], 1024
    $region97: #{tpu_custom_call.1} parent=1 // pred_fallthru
      _
    // Predicated region
    $region98: #{tpu_custom_call.1} parent=1 // pred_check
      _
    $region99: #{tpu_custom_call.1} parent=1 // pred_check_branch
      %182 = sbr.rel (0) target = $region101
    $region100: #{tpu_custom_call.1} parent=1 // pred_region
      %183 = dma.done [#allocation15], 1024
    $region101: #{tpu_custom_call.1} parent=1 // pred_fallthru
      _
    // Predicated region
    $region102: #{tpu_custom_call.1} parent=1 // pred_check
      _
    $region103: #{tpu_custom_call.1} parent=1 // pred_check_branch
      %185 = sbr.rel (0) target = $region105
    $region104: #{tpu_custom_call.1} parent=1 // pred_region
      %186 = dma.done [#allocation18], 1024
    $region105: #{tpu_custom_call.1} parent=1 // pred_fallthru
      _
    %v188 = vld [vmem:[#allocation2] sm:$0xf]
    %v189 = vld [vmem:[#allocation5] sm:$0xf]
    %v190 = vld [vmem:[#allocation7] sm:$0xff]
    %v191 = vld [vmem:[#allocation8] sm:$0xf]
    %v192 = vld [vmem:[#allocation8 + $0x4] sm:$0xf]
    %v193 = vld [vmem:[#allocation8 + $0x8] sm:$0xf]
    %v194 = vld [vmem:[#allocation8 + $0xc] sm:$0xf]
    %v195 = vld [vmem:[#allocation8 + $0x10] sm:$0xf]
    %v196 = vld [vmem:[#allocation8 + $0x14] sm:$0xf]
    %v197 = vld [vmem:[#allocation8 + $0x18] sm:$0xf]
    %v198 = vld [vmem:[#allocation8 + $0x1c] sm:$0xf]
    %v199 = vld [vmem:[#allocation8 + $0x20] sm:$0xf]
    %v200 = vld [vmem:[#allocation8 + $0x24] sm:$0xf]
    %v201 = vld [vmem:[#allocation8 + $0x28] sm:$0xf]
    %v202 = vld [vmem:[#allocation8 + $0x2c] sm:$0xf]
    %v203 = vld [vmem:[#allocation8 + $0x30] sm:$0xf]
    %v204 = vld [vmem:[#allocation8 + $0x34] sm:$0xf]
    %v205 = vld [vmem:[#allocation8 + $0x38] sm:$0xf]
    %v206 = vld [vmem:[#allocation8 + $0x3c] sm:$0xf]
    %v207 = vld [vmem:[%s4] sm:$0x1]
    %v209 = vlaneseq
    %v210 = vshrl.u32 %v209, 7
    %v211 = vsub.s32 0, %v210
    %v212 = vrot.slane %v207, %v211
    %v230 = vunpack.c.l.b16 %v191
    %v231 = vunpack.c.l.b16 %v192
    %v232 = vunpack.c.l.b16 %v193
    %v233 = vunpack.c.l.b16 %v194
    %v234 = vunpack.c.l.b16 %v195
    %v235 = vunpack.c.l.b16 %v196
    %v236 = vunpack.c.l.b16 %v197
    %v237 = vunpack.c.l.b16 %v198
    %v238 = vunpack.c.l.b16 %v199
    %v239 = vunpack.c.l.b16 %v200
    %v240 = vunpack.c.l.b16 %v201
    %v241 = vunpack.c.l.b16 %v202
    %v242 = vunpack.c.l.b16 %v203
    %v243 = vunpack.c.l.b16 %v204
    %v244 = vunpack.c.l.b16 %v205
    %v245 = vunpack.c.l.b16 %v206
    %v246 = vpack.c.b16 %v231, %v230
    %v247 = vpack.c.b16 %v233, %v232
    %v248 = vpack.c.b16 %v235, %v234
    %v249 = vpack.c.b16 %v237, %v236
    %v250 = vpack.c.b16 %v239, %v238
    %v251 = vpack.c.b16 %v241, %v240
    %v252 = vpack.c.b16 %v243, %v242
    %v253 = vpack.c.b16 %v245, %v244
    %262 = vmatprep.subr.bf16.mxu0 0
    %263 = vmatpush1.bf16.msra.mxu0 %v253
    %264 = vmatprep.subr.bf16.mxu0 0
    %265 = vmatpush1.bf16.msra.mxu0 %v252
    %266 = vmatprep.subr.bf16.mxu0 0
    %267 = vmatpush1.bf16.msra.mxu0 %v251
    %268 = vmatprep.subr.bf16.mxu0 0
    %269 = vmatpush1.bf16.msra.mxu0 %v250
    %270 = vmatprep.subr.bf16.mxu0 0
    %271 = vmatpush1.bf16.msra.mxu0 %v249
    %272 = vmatprep.subr.bf16.mxu0 0
    %273 = vmatpush1.bf16.msra.mxu0 %v248
    %274 = vmatprep.subr.bf16.mxu0 0
    %275 = vmatpush1.bf16.msra.mxu0 %v247
    %276 = vmatprep.subr.bf16.mxu0 0
    %277 = vmatpush1.bf16.msra.mxu0 %v246
    %278 = vmatprep.subr.bf16.mxu0 0
    %279 = vmatpush2.bf16.msra.mxu0 0
    %280 = vmatprep.subr.bf16.mxu0 0
    %281 = vmatpush2.bf16.msra.mxu0 0
    %282 = vmatprep.subr.bf16.mxu0 0
    %283 = vmatpush2.bf16.msra.mxu0 0
    %284 = vmatprep.subr.bf16.mxu0 0
    %285 = vmatpush2.bf16.msra.mxu0 0
    %286 = vmatprep.subr.bf16.mxu0 0
    %287 = vmatpush2.bf16.msra.mxu0 0
    %288 = vmatprep.subr.bf16.mxu0 0
    %289 = vmatpush2.bf16.msra.mxu0 0
    %290 = vmatprep.subr.bf16.mxu0 0
    %291 = vmatpush2.bf16.msra.mxu0 0
    %292 = vmatprep.subr.bf16.mxu0 0
    %293 = vmatpush2.bf16.msra.mxu0 0
    %294 = vmatprep.mubr.bf16.mxu0 0
    %295 = vmatmul.mubr.bf16.gmra.mxu0 %v188
    %v296 = vpop.f32.mrf.mxu0
    %v297 = vadd.f32 %v212, %v296
    %v298 = vpop.f32.mrf.mxu0
    %v299 = vpop.f32.mrf.mxu0
    %v300 = vpop.f32.mrf.mxu0
    %301 = vdwg.mxu0
    %vm302 = vcmp.gt.f32.partialorder %v297, 0.0
    %v303 = vmul.f32 %v297, 0.2
    %v304 = vsel %vm302, %v297, %v303
    %v305 = vpack.c.bf16 %v304, %v304
    %v306 = vld [vmem:[#allocation10] sm:$0xf]
    %v307 = vld [vmem:[#allocation10 + $0x4] sm:$0xf]
    %v308 = vld [vmem:[#allocation10 + $0x8] sm:$0xf]
    %v309 = vld [vmem:[#allocation10 + $0xc] sm:$0xf]
    %v310 = vld [vmem:[#allocation10 + $0x10] sm:$0xf]
    %v311 = vld [vmem:[#allocation10 + $0x14] sm:$0xf]
    %v312 = vld [vmem:[#allocation10 + $0x18] sm:$0xf]
    %v313 = vld [vmem:[#allocation10 + $0x1c] sm:$0xf]
    %v314 = vld [vmem:[#allocation10 + $0x20] sm:$0xf]
    %v315 = vld [vmem:[#allocation10 + $0x24] sm:$0xf]
    %v316 = vld [vmem:[#allocation10 + $0x28] sm:$0xf]
    %v317 = vld [vmem:[#allocation10 + $0x2c] sm:$0xf]
    %v318 = vld [vmem:[#allocation10 + $0x30] sm:$0xf]
    %v319 = vld [vmem:[#allocation10 + $0x34] sm:$0xf]
    %v320 = vld [vmem:[#allocation10 + $0x38] sm:$0xf]
    %v321 = vld [vmem:[#allocation10 + $0x3c] sm:$0xf]
    %v322 = vld [vmem:[%s6] sm:$0x1]
    %v324 = vlaneseq
    %v325 = vshrl.u32 %v324, 7
    %v326 = vsub.s32 0, %v325
    %v327 = vrot.slane %v322, %v326
    %v345 = vunpack.c.l.b16 %v306
    %v346 = vunpack.c.l.b16 %v307
    %v347 = vunpack.c.l.b16 %v308
    %v348 = vunpack.c.l.b16 %v309
    %v349 = vunpack.c.l.b16 %v310
    %v350 = vunpack.c.l.b16 %v311
    %v351 = vunpack.c.l.b16 %v312
    %v352 = vunpack.c.l.b16 %v313
    %v353 = vunpack.c.l.b16 %v314
    %v354 = vunpack.c.l.b16 %v315
    %v355 = vunpack.c.l.b16 %v316
    %v356 = vunpack.c.l.b16 %v317
    %v357 = vunpack.c.l.b16 %v318
    %v358 = vunpack.c.l.b16 %v319
    %v359 = vunpack.c.l.b16 %v320
    %v360 = vunpack.c.l.b16 %v321
    %v361 = vpack.c.b16 %v346, %v345
    %v362 = vpack.c.b16 %v348, %v347
    %v363 = vpack.c.b16 %v350, %v349
    %v364 = vpack.c.b16 %v352, %v351
    %v365 = vpack.c.b16 %v354, %v353
    %v366 = vpack.c.b16 %v356, %v355
    %v367 = vpack.c.b16 %v358, %v357
    %v368 = vpack.c.b16 %v360, %v359
    %377 = vmatprep.subr.bf16.mxu0 0
    %378 = vmatpush1.bf16.msra.mxu0 %v368
    %379 = vmatprep.subr.bf16.mxu0 0
    %380 = vmatpush1.bf16.msra.mxu0 %v367
    %381 = vmatprep.subr.bf16.mxu0 0
    %382 = vmatpush1.bf16.msra.mxu0 %v366
    %383 = vmatprep.subr.bf16.mxu0 0
    %384 = vmatpush1.bf16.msra.mxu0 %v365
    %385 = vmatprep.subr.bf16.mxu0 0
    %386 = vmatpush1.bf16.msra.mxu0 %v364
    %387 = vmatprep.subr.bf16.mxu0 0
    %388 = vmatpush1.bf16.msra.mxu0 %v363
    %389 = vmatprep.subr.bf16.mxu0 0
    %390 = vmatpush1.bf16.msra.mxu0 %v362
    %391 = vmatprep.subr.bf16.mxu0 0
    %392 = vmatpush1.bf16.msra.mxu0 %v361
    %393 = vmatprep.subr.bf16.mxu0 0
    %394 = vmatpush2.bf16.msra.mxu0 0
    %395 = vmatprep.subr.bf16.mxu0 0
    %396 = vmatpush2.bf16.msra.mxu0 0
    %397 = vmatprep.subr.bf16.mxu0 0
    %398 = vmatpush2.bf16.msra.mxu0 0
    %399 = vmatprep.subr.bf16.mxu0 0
    %400 = vmatpush2.bf16.msra.mxu0 0
    %401 = vmatprep.subr.bf16.mxu0 0
    %402 = vmatpush2.bf16.msra.mxu0 0
    %403 = vmatprep.subr.bf16.mxu0 0
    %404 = vmatpush2.bf16.msra.mxu0 0
    %405 = vmatprep.subr.bf16.mxu0 0
    %406 = vmatpush2.bf16.msra.mxu0 0
    %407 = vmatprep.subr.bf16.mxu0 0
    %408 = vmatpush2.bf16.msra.mxu0 0
    %409 = vmatprep.mubr.bf16.mxu0 0
    %410 = vmatmul.mubr.bf16.gmra.mxu0 %v305
    %v411 = vpop.f32.mrf.mxu0
    %v412 = vadd.f32 %v327, %v411
    %v413 = vpop.f32.mrf.mxu0
    %v414 = vpop.f32.mrf.mxu0
    %v415 = vpop.f32.mrf.mxu0
    %416 = vdwg.mxu0
    %vm417 = vcmp.gt.f32.partialorder %v412, 0.0
    %v418 = vmul.f32 %v412, 0.2
    %v419 = vsel %vm417, %v412, %v418
    %v420 = vpack.c.bf16 %v419, %v419
    %v421 = vld [vmem:[#allocation11] sm:$0xff]
    %v422 = vld [vmem:[#allocation11 + $0x8] sm:$0xff]
    %v423 = vld [vmem:[#allocation11 + $0x10] sm:$0xff]
    %v424 = vld [vmem:[#allocation11 + $0x18] sm:$0xff]
    %v425 = vld [vmem:[#allocation11 + $0x20] sm:$0xff]
    %v426 = vld [vmem:[#allocation11 + $0x28] sm:$0xff]
    %v427 = vld [vmem:[#allocation11 + $0x30] sm:$0xff]
    %v428 = vld [vmem:[#allocation11 + $0x38] sm:$0xff]
    %v429 = vld [vmem:[#allocation11 + $0x40] sm:$0xff]
    %v430 = vld [vmem:[#allocation11 + $0x48] sm:$0xff]
    %v431 = vld [vmem:[#allocation11 + $0x50] sm:$0xff]
    %v432 = vld [vmem:[#allocation11 + $0x58] sm:$0xff]
    %v433 = vld [vmem:[#allocation11 + $0x60] sm:$0xff]
    %v434 = vld [vmem:[#allocation11 + $0x68] sm:$0xff]
    %v435 = vld [vmem:[#allocation11 + $0x70] sm:$0xff]
    %v436 = vld [vmem:[#allocation11 + $0x78] sm:$0xff]
    %v437 = vld [vmem:[%s8] sm:$0x3]
    %v439 = vlaneseq
    %v440 = vshrl.u32 %v439, 7
    %v441 = vsub.s32 0, %v440
    %v442 = vrot.slane %v437, %v441
    %v443 = vlaneseq
    %v444 = vshrl.u32 %v443, 7
    %v445 = vsub.s32 1, %v444
    %v446 = vrot.slane %v437, %v445
    %v465 = vunpack.c.l.b16 %v421
    %v466 = vunpack.c.h.b16 %v421
    %v467 = vunpack.c.l.b16 %v422
    %v468 = vunpack.c.h.b16 %v422
    %v469 = vunpack.c.l.b16 %v423
    %v470 = vunpack.c.h.b16 %v423
    %v471 = vunpack.c.l.b16 %v424
    %v472 = vunpack.c.h.b16 %v424
    %v473 = vunpack.c.l.b16 %v425
    %v474 = vunpack.c.h.b16 %v425
    %v475 = vunpack.c.l.b16 %v426
    %v476 = vunpack.c.h.b16 %v426
    %v477 = vunpack.c.l.b16 %v427
    %v478 = vunpack.c.h.b16 %v427
    %v479 = vunpack.c.l.b16 %v428
    %v480 = vunpack.c.h.b16 %v428
    %v481 = vunpack.c.l.b16 %v429
    %v482 = vunpack.c.h.b16 %v429
    %v483 = vunpack.c.l.b16 %v430
    %v484 = vunpack.c.h.b16 %v430
    %v485 = vunpack.c.l.b16 %v431
    %v486 = vunpack.c.h.b16 %v431
    %v487 = vunpack.c.l.b16 %v432
    %v488 = vunpack.c.h.b16 %v432
    %v489 = vunpack.c.l.b16 %v433
    %v490 = vunpack.c.h.b16 %v433
    %v491 = vunpack.c.l.b16 %v434
    %v492 = vunpack.c.h.b16 %v434
    %v493 = vunpack.c.l.b16 %v435
    %v494 = vunpack.c.h.b16 %v435
    %v495 = vunpack.c.l.b16 %v436
    %v496 = vunpack.c.h.b16 %v436
    %v497 = vpack.c.b16 %v467, %v465
    %v498 = vpack.c.b16 %v468, %v466
    %v499 = vpack.c.b16 %v471, %v469
    %v500 = vpack.c.b16 %v472, %v470
    %v501 = vpack.c.b16 %v475, %v473
    %v502 = vpack.c.b16 %v476, %v474
    %v503 = vpack.c.b16 %v479, %v477
    %v504 = vpack.c.b16 %v480, %v478
    %v505 = vpack.c.b16 %v483, %v481
    %v506 = vpack.c.b16 %v484, %v482
    %v507 = vpack.c.b16 %v487, %v485
    %v508 = vpack.c.b16 %v488, %v486
    %v509 = vpack.c.b16 %v491, %v489
    %v510 = vpack.c.b16 %v492, %v490
    %v511 = vpack.c.b16 %v495, %v493
    %v512 = vpack.c.b16 %v496, %v494
    %529 = vmatprep.subr.bf16.mxu0 %v512
    %530 = vmatpush1.bf16.msra.mxu0 %v511
    %531 = vmatprep.subr.bf16.mxu0 %v510
    %532 = vmatpush1.bf16.msra.mxu0 %v509
    %533 = vmatprep.subr.bf16.mxu0 %v508
    %534 = vmatpush1.bf16.msra.mxu0 %v507
    %535 = vmatprep.subr.bf16.mxu0 %v506
    %536 = vmatpush1.bf16.msra.mxu0 %v505
    %537 = vmatprep.subr.bf16.mxu0 %v504
    %538 = vmatpush1.bf16.msra.mxu0 %v503
    %539 = vmatprep.subr.bf16.mxu0 %v502
    %540 = vmatpush1.bf16.msra.mxu0 %v501
    %541 = vmatprep.subr.bf16.mxu0 %v500
    %542 = vmatpush1.bf16.msra.mxu0 %v499
    %543 = vmatprep.subr.bf16.mxu0 %v498
    %544 = vmatpush1.bf16.msra.mxu0 %v497
    %545 = vmatprep.subr.bf16.mxu0 0
    %546 = vmatpush2.bf16.msra.mxu0 0
    %547 = vmatprep.subr.bf16.mxu0 0
    %548 = vmatpush2.bf16.msra.mxu0 0
    %549 = vmatprep.subr.bf16.mxu0 0
    %550 = vmatpush2.bf16.msra.mxu0 0
    %551 = vmatprep.subr.bf16.mxu0 0
    %552 = vmatpush2.bf16.msra.mxu0 0
    %553 = vmatprep.subr.bf16.mxu0 0
    %554 = vmatpush2.bf16.msra.mxu0 0
    %555 = vmatprep.subr.bf16.mxu0 0
    %556 = vmatpush2.bf16.msra.mxu0 0
    %557 = vmatprep.subr.bf16.mxu0 0
    %558 = vmatpush2.bf16.msra.mxu0 0
    %559 = vmatprep.subr.bf16.mxu0 0
    %560 = vmatpush2.bf16.msra.mxu0 0
    %561 = vmatprep.mubr.bf16.mxu0 0
    %562 = vmatmul.mubr.bf16.gmra.mxu0 %v420
    %v563 = vpop.f32.mrf.mxu0
    %v564 = vadd.f32 %v442, %v563
    %v565 = vpop.f32.mrf.mxu0
    %v566 = vadd.f32 %v446, %v565
    %v567 = vpop.f32.mrf.mxu0
    %v568 = vpop.f32.mrf.mxu0
    %569 = vdwg.mxu0
    %v570 = vmul.f32 %v566, 0.5
    %v571 = vmul.f32 %v570, 1.442695
    %v572 = vpow.pop %v571
    %v573 = vmul.f32 %v572, %v190
    %v574 = vadd.f32 %v564, %v573
    %v575 = vpack.c.bf16 %v574, %v574
    %v576 = vld [vmem:[#allocation13] sm:$0xf]
    %v577 = vld [vmem:[#allocation13 + $0x4] sm:$0xf]
    %v578 = vld [vmem:[#allocation13 + $0x8] sm:$0xf]
    %v579 = vld [vmem:[#allocation13 + $0xc] sm:$0xf]
    %v580 = vld [vmem:[#allocation13 + $0x10] sm:$0xf]
    %v581 = vld [vmem:[#allocation13 + $0x14] sm:$0xf]
    %v582 = vld [vmem:[#allocation13 + $0x18] sm:$0xf]
    %v583 = vld [vmem:[#allocation13 + $0x1c] sm:$0xf]
    %v584 = vld [vmem:[#allocation13 + $0x20] sm:$0xf]
    %v585 = vld [vmem:[#allocation13 + $0x24] sm:$0xf]
    %v586 = vld [vmem:[#allocation13 + $0x28] sm:$0xf]
    %v587 = vld [vmem:[#allocation13 + $0x2c] sm:$0xf]
    %v588 = vld [vmem:[#allocation13 + $0x30] sm:$0xf]
    %v589 = vld [vmem:[#allocation13 + $0x34] sm:$0xf]
    %v590 = vld [vmem:[#allocation13 + $0x38] sm:$0xf]
    %v591 = vld [vmem:[#allocation13 + $0x3c] sm:$0xf]
    %v592 = vld [vmem:[#allocation14] sm:$0xf]
    %v593 = vld [vmem:[#allocation14 + $0x4] sm:$0xf]
    %v594 = vld [vmem:[#allocation14 + $0x8] sm:$0xf]
    %v595 = vld [vmem:[#allocation14 + $0xc] sm:$0xf]
    %v596 = vld [vmem:[#allocation14 + $0x10] sm:$0xf]
    %v597 = vld [vmem:[#allocation14 + $0x14] sm:$0xf]
    %v598 = vld [vmem:[#allocation14 + $0x18] sm:$0xf]
    %v599 = vld [vmem:[#allocation14 + $0x1c] sm:$0xf]
    %v600 = vld [vmem:[#allocation14 + $0x20] sm:$0xf]
    %v601 = vld [vmem:[#allocation14 + $0x24] sm:$0xf]
    %v602 = vld [vmem:[#allocation14 + $0x28] sm:$0xf]
    %v603 = vld [vmem:[#allocation14 + $0x2c] sm:$0xf]
    %v604 = vld [vmem:[#allocation14 + $0x30] sm:$0xf]
    %v605 = vld [vmem:[#allocation14 + $0x34] sm:$0xf]
    %v606 = vld [vmem:[#allocation14 + $0x38] sm:$0xf]
    %v607 = vld [vmem:[#allocation14 + $0x3c] sm:$0xf]
    %v624 = vunpack.c.l.b16 %v592
    %v625 = vunpack.c.l.b16 %v593
    %v626 = vunpack.c.l.b16 %v594
    %v627 = vunpack.c.l.b16 %v595
    %v628 = vunpack.c.l.b16 %v596
    %v629 = vunpack.c.l.b16 %v597
    %v630 = vunpack.c.l.b16 %v598
    %v631 = vunpack.c.l.b16 %v599
    %v632 = vunpack.c.l.b16 %v600
    %v633 = vunpack.c.l.b16 %v601
    %v634 = vunpack.c.l.b16 %v602
    %v635 = vunpack.c.l.b16 %v603
    %v636 = vunpack.c.l.b16 %v604
    %v637 = vunpack.c.l.b16 %v605
    %v638 = vunpack.c.l.b16 %v606
    %v639 = vunpack.c.l.b16 %v607
    %v640 = vpack.c.b16 %v625, %v624
    %v641 = vpack.c.b16 %v627, %v626
    %v642 = vpack.c.b16 %v629, %v628
    %v643 = vpack.c.b16 %v631, %v630
    %v644 = vpack.c.b16 %v633, %v632
    %v645 = vpack.c.b16 %v635, %v634
    %v646 = vpack.c.b16 %v637, %v636
    %v647 = vpack.c.b16 %v639, %v638
    %656 = vmatprep.subr.bf16.mxu0 0
    %657 = vmatpush1.bf16.msra.mxu0 %v647
    %658 = vmatprep.subr.bf16.mxu0 0
    %659 = vmatpush1.bf16.msra.mxu0 %v646
    %660 = vmatprep.subr.bf16.mxu0 0
    %661 = vmatpush1.bf16.msra.mxu0 %v645
    %662 = vmatprep.subr.bf16.mxu0 0
    %663 = vmatpush1.bf16.msra.mxu0 %v644
    %664 = vmatprep.subr.bf16.mxu0 0
    %665 = vmatpush1.bf16.msra.mxu0 %v643
    %666 = vmatprep.subr.bf16.mxu0 0
    %667 = vmatpush1.bf16.msra.mxu0 %v642
    %668 = vmatprep.subr.bf16.mxu0 0
    %669 = vmatpush1.bf16.msra.mxu0 %v641
    %670 = vmatprep.subr.bf16.mxu0 0
    %671 = vmatpush1.bf16.msra.mxu0 %v640
    %672 = vmatprep.subr.bf16.mxu0 0
    %673 = vmatpush2.bf16.msra.mxu0 0
    %674 = vmatprep.subr.bf16.mxu0 0
    %675 = vmatpush2.bf16.msra.mxu0 0
    %676 = vmatprep.subr.bf16.mxu0 0
    %677 = vmatpush2.bf16.msra.mxu0 0
    %678 = vmatprep.subr.bf16.mxu0 0
    %679 = vmatpush2.bf16.msra.mxu0 0
    %680 = vmatprep.subr.bf16.mxu0 0
    %681 = vmatpush2.bf16.msra.mxu0 0
    %682 = vmatprep.subr.bf16.mxu0 0
    %683 = vmatpush2.bf16.msra.mxu0 0
    %684 = vmatprep.subr.bf16.mxu0 0
    %685 = vmatpush2.bf16.msra.mxu0 0
    %686 = vmatprep.subr.bf16.mxu0 0
    %687 = vmatpush2.bf16.msra.mxu0 0
    %688 = vmatprep.mubr.bf16.mxu0 0
    %689 = vmatmul.mubr.bf16.gmra.mxu0 %v189
    %v690 = vpop.f32.mrf.mxu0
    %v691 = vadd.f32 0.0, %v690
    %v692 = vpop.f32.mrf.mxu0
    %v693 = vpop.f32.mrf.mxu0
    %v694 = vpop.f32.mrf.mxu0
    %695 = vdwg.mxu0
    %v712 = vunpack.c.l.b16 %v576
    %v713 = vunpack.c.l.b16 %v577
    %v714 = vunpack.c.l.b16 %v578
    %v715 = vunpack.c.l.b16 %v579
    %v716 = vunpack.c.l.b16 %v580
    %v717 = vunpack.c.l.b16 %v581
    %v718 = vunpack.c.l.b16 %v582
    %v719 = vunpack.c.l.b16 %v583
    %v720 = vunpack.c.l.b16 %v584
    %v721 = vunpack.c.l.b16 %v585
    %v722 = vunpack.c.l.b16 %v586
    %v723 = vunpack.c.l.b16 %v587
    %v724 = vunpack.c.l.b16 %v588
    %v725 = vunpack.c.l.b16 %v589
    %v726 = vunpack.c.l.b16 %v590
    %v727 = vunpack.c.l.b16 %v591
    %v728 = vpack.c.b16 %v713, %v712
    %v729 = vpack.c.b16 %v715, %v714
    %v730 = vpack.c.b16 %v717, %v716
    %v731 = vpack.c.b16 %v719, %v718
    %v732 = vpack.c.b16 %v721, %v720
    %v733 = vpack.c.b16 %v723, %v722
    %v734 = vpack.c.b16 %v725, %v724
    %v735 = vpack.c.b16 %v727, %v726
    %744 = vmatprep.subr.bf16.mxu0 0
    %745 = vmatpush1.bf16.msra.mxu0 %v735
    %746 = vmatprep.subr.bf16.mxu0 0
    %747 = vmatpush1.bf16.msra.mxu0 %v734
    %748 = vmatprep.subr.bf16.mxu0 0
    %749 = vmatpush1.bf16.msra.mxu0 %v733
    %750 = vmatprep.subr.bf16.mxu0 0
    %751 = vmatpush1.bf16.msra.mxu0 %v732
    %752 = vmatprep.subr.bf16.mxu0 0
    %753 = vmatpush1.bf16.msra.mxu0 %v731
    %754 = vmatprep.subr.bf16.mxu0 0
    %755 = vmatpush1.bf16.msra.mxu0 %v730
    %756 = vmatprep.subr.bf16.mxu0 0
    %757 = vmatpush1.bf16.msra.mxu0 %v729
    %758 = vmatprep.subr.bf16.mxu0 0
    %759 = vmatpush1.bf16.msra.mxu0 %v728
    %760 = vmatprep.subr.bf16.mxu0 0
    %761 = vmatpush2.bf16.msra.mxu0 0
    %762 = vmatprep.subr.bf16.mxu0 0
    %763 = vmatpush2.bf16.msra.mxu0 0
    %764 = vmatprep.subr.bf16.mxu0 0
    %765 = vmatpush2.bf16.msra.mxu0 0
    %766 = vmatprep.subr.bf16.mxu0 0
    %767 = vmatpush2.bf16.msra.mxu0 0
    %768 = vmatprep.subr.bf16.mxu0 0
    %769 = vmatpush2.bf16.msra.mxu0 0
    %770 = vmatprep.subr.bf16.mxu0 0
    %771 = vmatpush2.bf16.msra.mxu0 0
    %772 = vmatprep.subr.bf16.mxu0 0
    %773 = vmatpush2.bf16.msra.mxu0 0
    %774 = vmatprep.subr.bf16.mxu0 0
    %775 = vmatpush2.bf16.msra.mxu0 0
    %776 = vmatprep.mubr.bf16.mxu0 0
    %777 = vmatmul.mubr.bf16.gmra.mxu0 %v575
    %v778 = vpop.f32.mrf.mxu0
    %v779 = vadd.f32 %v691, %v778
    %v780 = vpop.f32.mrf.mxu0
    %v781 = vpop.f32.mrf.mxu0
    %v782 = vpop.f32.mrf.mxu0
    %783 = vdwg.mxu0
    %v784 = vld [vmem:[%s11] sm:$0x1]
    %v786 = vlaneseq
    %v787 = vshrl.u32 %v786, 7
    %v788 = vsub.s32 0, %v787
    %v789 = vrot.slane %v784, %v788
    %v791 = vadd.f32 %v779, %v789
    %vm792 = vcmp.gt.f32.partialorder %v791, 0.0
    %v793 = vmul.f32 %v791, 0.2
    %v794 = vsel %vm792, %v791, %v793
    %v795 = vpack.c.bf16 %v794, %v794
    %v796 = vld [vmem:[#allocation16] sm:$0xf]
    %v797 = vld [vmem:[#allocation16 + $0x4] sm:$0xf]
    %v798 = vld [vmem:[#allocation16 + $0x8] sm:$0xf]
    %v799 = vld [vmem:[#allocation16 + $0xc] sm:$0xf]
    %v800 = vld [vmem:[#allocation16 + $0x10] sm:$0xf]
    %v801 = vld [vmem:[#allocation16 + $0x14] sm:$0xf]
    %v802 = vld [vmem:[#allocation16 + $0x18] sm:$0xf]
    %v803 = vld [vmem:[#allocation16 + $0x1c] sm:$0xf]
    %v804 = vld [vmem:[#allocation16 + $0x20] sm:$0xf]
    %v805 = vld [vmem:[#allocation16 + $0x24] sm:$0xf]
    %v806 = vld [vmem:[#allocation16 + $0x28] sm:$0xf]
    %v807 = vld [vmem:[#allocation16 + $0x2c] sm:$0xf]
    %v808 = vld [vmem:[#allocation16 + $0x30] sm:$0xf]
    %v809 = vld [vmem:[#allocation16 + $0x34] sm:$0xf]
    %v810 = vld [vmem:[#allocation16 + $0x38] sm:$0xf]
    %v811 = vld [vmem:[#allocation16 + $0x3c] sm:$0xf]
    %v812 = vld [vmem:[%s13] sm:$0x1]
    %v814 = vlaneseq
    %v815 = vshrl.u32 %v814, 7
    %v816 = vsub.s32 0, %v815
    %v817 = vrot.slane %v812, %v816
    %v835 = vunpack.c.l.b16 %v796
    %v836 = vunpack.c.l.b16 %v797
    %v837 = vunpack.c.l.b16 %v798
    %v838 = vunpack.c.l.b16 %v799
    %v839 = vunpack.c.l.b16 %v800
    %v840 = vunpack.c.l.b16 %v801
    %v841 = vunpack.c.l.b16 %v802
    %v842 = vunpack.c.l.b16 %v803
    %v843 = vunpack.c.l.b16 %v804
    %v844 = vunpack.c.l.b16 %v805
    %v845 = vunpack.c.l.b16 %v806
    %v846 = vunpack.c.l.b16 %v807
    %v847 = vunpack.c.l.b16 %v808
    %v848 = vunpack.c.l.b16 %v809
    %v849 = vunpack.c.l.b16 %v810
    %v850 = vunpack.c.l.b16 %v811
    %v851 = vpack.c.b16 %v836, %v835
    %v852 = vpack.c.b16 %v838, %v837
    %v853 = vpack.c.b16 %v840, %v839
    %v854 = vpack.c.b16 %v842, %v841
    %v855 = vpack.c.b16 %v844, %v843
    %v856 = vpack.c.b16 %v846, %v845
    %v857 = vpack.c.b16 %v848, %v847
    %v858 = vpack.c.b16 %v850, %v849
    %867 = vmatprep.subr.bf16.mxu0 0
    %868 = vmatpush1.bf16.msra.mxu0 %v858
    %869 = vmatprep.subr.bf16.mxu0 0
    %870 = vmatpush1.bf16.msra.mxu0 %v857
    %871 = vmatprep.subr.bf16.mxu0 0
    %872 = vmatpush1.bf16.msra.mxu0 %v856
    %873 = vmatprep.subr.bf16.mxu0 0
    %874 = vmatpush1.bf16.msra.mxu0 %v855
    %875 = vmatprep.subr.bf16.mxu0 0
    %876 = vmatpush1.bf16.msra.mxu0 %v854
    %877 = vmatprep.subr.bf16.mxu0 0
    %878 = vmatpush1.bf16.msra.mxu0 %v853
    %879 = vmatprep.subr.bf16.mxu0 0
    %880 = vmatpush1.bf16.msra.mxu0 %v852
    %881 = vmatprep.subr.bf16.mxu0 0
    %882 = vmatpush1.bf16.msra.mxu0 %v851
    %883 = vmatprep.subr.bf16.mxu0 0
    %884 = vmatpush2.bf16.msra.mxu0 0
    %885 = vmatprep.subr.bf16.mxu0 0
    %886 = vmatpush2.bf16.msra.mxu0 0
    %887 = vmatprep.subr.bf16.mxu0 0
    %888 = vmatpush2.bf16.msra.mxu0 0
    %889 = vmatprep.subr.bf16.mxu0 0
    %890 = vmatpush2.bf16.msra.mxu0 0
    %891 = vmatprep.subr.bf16.mxu0 0
    %892 = vmatpush2.bf16.msra.mxu0 0
    %893 = vmatprep.subr.bf16.mxu0 0
    %894 = vmatpush2.bf16.msra.mxu0 0
    %895 = vmatprep.subr.bf16.mxu0 0
    %896 = vmatpush2.bf16.msra.mxu0 0
    %897 = vmatprep.subr.bf16.mxu0 0
    %898 = vmatpush2.bf16.msra.mxu0 0
    %899 = vmatprep.mubr.bf16.mxu0 0
    %900 = vmatmul.mubr.bf16.gmra.mxu0 %v795
    %v901 = vpop.f32.mrf.mxu0
    %v902 = vadd.f32 %v817, %v901
    %v903 = vpop.f32.mrf.mxu0
    %v904 = vpop.f32.mrf.mxu0
    %v905 = vpop.f32.mrf.mxu0
    %906 = vdwg.mxu0
    %vm907 = vcmp.gt.f32.partialorder %v902, 0.0
    %v908 = vmul.f32 %v902, 0.2
    %v909 = vsel %vm907, %v902, %v908
    %v910 = vpack.c.bf16 %v909, %v909
    %v911 = vld [vmem:[#allocation17] sm:$0xf]
    %v912 = vld [vmem:[#allocation17 + $0x4] sm:$0xf]
    %v913 = vld [vmem:[#allocation17 + $0x8] sm:$0xf]
    %v914 = vld [vmem:[#allocation17 + $0xc] sm:$0xf]
    %v915 = vld [vmem:[#allocation17 + $0x10] sm:$0xf]
    %v916 = vld [vmem:[#allocation17 + $0x14] sm:$0xf]
    %v917 = vld [vmem:[#allocation17 + $0x18] sm:$0xf]
    %v918 = vld [vmem:[#allocation17 + $0x1c] sm:$0xf]
    %v919 = vld [vmem:[#allocation17 + $0x20] sm:$0xf]
    %v920 = vld [vmem:[#allocation17 + $0x24] sm:$0xf]
    %v921 = vld [vmem:[#allocation17 + $0x28] sm:$0xf]
    %v922 = vld [vmem:[#allocation17 + $0x2c] sm:$0xf]
    %v923 = vld [vmem:[#allocation17 + $0x30] sm:$0xf]
    %v924 = vld [vmem:[#allocation17 + $0x34] sm:$0xf]
    %v925 = vld [vmem:[#allocation17 + $0x38] sm:$0xf]
    %v926 = vld [vmem:[#allocation17 + $0x3c] sm:$0xf]
    %v927 = vld [vmem:[%s15] sm:$0x1]
    %v929 = vlaneseq
    %v930 = vshrl.u32 %v929, 7
    %v931 = vsub.s32 0, %v930
    %v932 = vrot.slane %v927, %v931
    %v950 = vunpack.c.l.b16 %v911
    %v951 = vunpack.c.l.b16 %v912
    %v952 = vunpack.c.l.b16 %v913
    %v953 = vunpack.c.l.b16 %v914
    %v954 = vunpack.c.l.b16 %v915
    %v955 = vunpack.c.l.b16 %v916
    %v956 = vunpack.c.l.b16 %v917
    %v957 = vunpack.c.l.b16 %v918
    %v958 = vunpack.c.l.b16 %v919
    %v959 = vunpack.c.l.b16 %v920
    %v960 = vunpack.c.l.b16 %v921
    %v961 = vunpack.c.l.b16 %v922
    %v962 = vunpack.c.l.b16 %v923
    %v963 = vunpack.c.l.b16 %v924
    %v964 = vunpack.c.l.b16 %v925
    %v965 = vunpack.c.l.b16 %v926
    %v966 = vpack.c.b16 %v951, %v950
    %v967 = vpack.c.b16 %v953, %v952
    %v968 = vpack.c.b16 %v955, %v954
    %v969 = vpack.c.b16 %v957, %v956
    %v970 = vpack.c.b16 %v959, %v958
    %v971 = vpack.c.b16 %v961, %v960
    %v972 = vpack.c.b16 %v963, %v962
    %v973 = vpack.c.b16 %v965, %v964
    %982 = vmatprep.subr.bf16.mxu0 0
    %983 = vmatpush1.bf16.msra.mxu0 %v973
    %984 = vmatprep.subr.bf16.mxu0 0
    %985 = vmatpush1.bf16.msra.mxu0 %v972
    %986 = vmatprep.subr.bf16.mxu0 0
    %987 = vmatpush1.bf16.msra.mxu0 %v971
    %988 = vmatprep.subr.bf16.mxu0 0
    %989 = vmatpush1.bf16.msra.mxu0 %v970
    %990 = vmatprep.subr.bf16.mxu0 0
    %991 = vmatpush1.bf16.msra.mxu0 %v969
    %992 = vmatprep.subr.bf16.mxu0 0
    %993 = vmatpush1.bf16.msra.mxu0 %v968
    %994 = vmatprep.subr.bf16.mxu0 0
    %995 = vmatpush1.bf16.msra.mxu0 %v967
    %996 = vmatprep.subr.bf16.mxu0 0
    %997 = vmatpush1.bf16.msra.mxu0 %v966
    %998 = vmatprep.subr.bf16.mxu0 0
    %999 = vmatpush2.bf16.msra.mxu0 0
    %1000 = vmatprep.subr.bf16.mxu0 0
    %1001 = vmatpush2.bf16.msra.mxu0 0
    %1002 = vmatprep.subr.bf16.mxu0 0
    %1003 = vmatpush2.bf16.msra.mxu0 0
    %1004 = vmatprep.subr.bf16.mxu0 0
    %1005 = vmatpush2.bf16.msra.mxu0 0
    %1006 = vmatprep.subr.bf16.mxu0 0
    %1007 = vmatpush2.bf16.msra.mxu0 0
    %1008 = vmatprep.subr.bf16.mxu0 0
    %1009 = vmatpush2.bf16.msra.mxu0 0
    %1010 = vmatprep.subr.bf16.mxu0 0
    %1011 = vmatpush2.bf16.msra.mxu0 0
    %1012 = vmatprep.subr.bf16.mxu0 0
    %1013 = vmatpush2.bf16.msra.mxu0 0
    %1014 = vmatprep.mubr.bf16.mxu0 0
    %1015 = vmatmul.mubr.bf16.gmra.mxu0 %v910
    %v1016 = vpop.f32.mrf.mxu0
    %v1017 = vadd.f32 %v932, %v1016
    %v1018 = vpop.f32.mrf.mxu0
    %v1019 = vpop.f32.mrf.mxu0
    %v1020 = vpop.f32.mrf.mxu0
    %1021 = vdwg.mxu0
    %1022 = vst [vmem:[#allocation19] sm:$0xff] %v1017
    %1023 = vst [vmem:[#allocation20] sm:$0xff] %v564
    %1024 = vst [vmem:[#allocation20 + $0x8] sm:$0xff] %v566
    // Predicated region
    $region106: #{tpu_custom_call.1} parent=1 // pred_check
      _
    $region107: #{tpu_custom_call.1} parent=1 // pred_check_branch
      %1026 = sbr.rel (0) target = $region109
    $region108: #{tpu_custom_call.1} parent=1 // pred_region
      %s1028 = ssub.s32 128, 128
      %1029 = vsyncadd [#allocation4], %s1028
      %s1031 = sshll.u32 [#allocation19], 4
      %s1032 = int_to_ptr.vmem [resolvable:$true] %s1031
      %1034 = dma.vmem_to_hbm [thread:$0]  %s1032, 128, %s16, [#allocation4]
    $region109: #{tpu_custom_call.1} parent=1 // pred_fallthru
      _
    // Predicated region
    $region110: #{tpu_custom_call.1} parent=1 // pred_check
      _
    $region111: #{tpu_custom_call.1} parent=1 // pred_check_branch
      %1036 = sbr.rel (0) target = $region113
    $region112: #{tpu_custom_call.1} parent=1 // pred_region
      %s1038 = ssub.s32 256, 256
      %1039 = vsyncadd [#allocation21], %s1038
      %s1041 = sshll.u32 [#allocation20], 4
      %s1042 = int_to_ptr.vmem [resolvable:$true] %s1041
      %1044 = dma.vmem_to_hbm [thread:$0]  %s1042, 256, %s17, [#allocation21]
    $region113: #{tpu_custom_call.1} parent=1 // pred_fallthru
      _
    // Predicated region
    $region114: #{tpu_custom_call.1} parent=1 // pred_check
      _
    $region115: #{tpu_custom_call.1} parent=1 // pred_check_branch
      %1046 = sbr.rel (0) target = $region117
    $region116: #{tpu_custom_call.1} parent=1 // pred_region
      %1047 = dma.done [#allocation4], 128
    $region117: #{tpu_custom_call.1} parent=1 // pred_fallthru
      _
    // Predicated region
    $region118: #{tpu_custom_call.1} parent=1 // pred_check
      _
    $region119: #{tpu_custom_call.1} parent=1 // pred_check_branch
      %1049 = sbr.rel (0) target = $region121
    $region120: #{tpu_custom_call.1} parent=1 // pred_region
      %1050 = dma.done [#allocation21], 256
    $region121: #{tpu_custom_call.1} parent=1 // pred_fallthru
      _
    %1051 = vsyncpa [#allocation3], 1
    %1052 = vsyncpa [#allocation6], 1
    %1053 = vsyncpa [#allocation9], 1
    %1054 = vsyncpa [#allocation12], 1
    %1055 = vsyncpa [#allocation15], 1
    %1056 = vsyncpa [#allocation18], 1
    %1057 = vsyncpa [#allocation4], 1
    %1058 = vsyncpa [#allocation21], 1

</llo_original>
